<compile_context>
chip_gen: v5e
topology: v5e:2x2
jax: 0.10.0
libtpu: 0.0.40
codegen_flags: <defaults>
</compile_context>

<pallas_src>
import functools
import math

import jax
import jax.numpy as jnp
import numpy as np
from jax.experimental import pallas as pl
from jax.experimental.pallas import tpu as pltpu


LANE = 128
_VMEM_LIMIT = 32 * 1024 * 1024  # safe on v5e/v6e (128 MiB VMEM) and v7x (64 MiB)


def _cdiv(a, b):
    return (a + b - 1) // b


def _round_up(x, m):
    return ((x + m - 1) // m) * m


def _choose_tiles(M, max_tile=1024):
    """Row-tile size, padded extent and step count.

    Guarantees an even number (>= 2) of grid steps so the 'parallel' grid axis
    feeds both v7x TensorCores; harmless on single-TC v5e/v6e.  Tiles are
    multiples of 16 rows (bf16 sublane packing friendly).
    """
    if M <= 2 * max_tile:
        tm = max(16, _round_up(_cdiv(M, 2), 16))
        steps = 2
    else:
        tm = max_tile
        steps = _cdiv(M, tm)
        if steps % 2:
            steps += 1
    return tm, tm * steps, steps


# ----------------------------------------------------------------------------
# Pallas kernels
# ----------------------------------------------------------------------------
def _fused_base_heads_kernel(x_ref, wb_ref, bb_ref, wh_ref, bh_ref, o_ref):
    """One row-tile of base net + ALL head nets (1x1 convs, channels-last).

    feat = relu(x @ Wb + bb)        (tm, FEATp)   bf16 MXU, f32 accumulate
    out  = feat @ Wh_concat + bh    (tm, Coutp)   lane-dense 128-padded store
    """
    feat = jnp.dot(x_ref[...], wb_ref[...], preferred_element_type=jnp.float32)
    feat = jnp.maximum(feat + bb_ref[...], 0.0)
    out = jnp.dot(feat.astype(jnp.bfloat16), wh_ref[...],
                  preferred_element_type=jnp.float32)
    o_ref[...] = (out + bh_ref[...]).astype(o_ref.dtype)


def _merge_kernel(red_ref, orig_ref, emat_ref, scale_ref, add_ref, o_ref):
    """Shell2Scale.merge_heads, BOTH heads fused, one row-tile.

    cmp     = (reduced > original_strided) as 0/1 (all channels; only the
              confidence lanes matter)
    mask    = cmp @ E > 0.5   (E is a 0/1 selection matrix mapping every output
              channel to its head's confidence channel; padded-lane columns are
              all-zero so padded lanes keep the original zeros.  Exact: 0/1
              arithmetic is exact in any MXU precision, and it rides an MXU
              slot that is otherwise idle in this memory-bound kernel.)
    scaled  = reduced * scale_c + add_c   (0.5 / +log(stride) / *stride rules)
    out     = where(mask, scaled, original_strided)
    """
    red = red_ref[...]
    orig = orig_ref[...]
    cmp = (red > orig).astype(jnp.float32)
    mask = jnp.dot(cmp, emat_ref[...],
                   preferred_element_type=jnp.float32) > 0.5
    scaled = red * scale_ref[...] + add_ref[...]
    o_ref[...] = jnp.where(mask, scaled, orig)


# ----------------------------------------------------------------------------
# Wrappers around pallas_call
# ----------------------------------------------------------------------------
def fused_base_heads(x_nhwc, params):
    """Base net + concatenated head nets on a channels-last input.

    x_nhwc: (B, H, W, Cin) -> (B, H, W, Coutp) 128-padded f32 output slab
    (valid channels are the first sum-of-head-channels lanes).
    """
    B, H, W, Cin = x_nhwc.shape
    M = B * H * W
    xm = x_nhwc.reshape(M, Cin).astype(jnp.bfloat16)

    tm, Mp, steps = _choose_tiles(M)
    if Mp != M:
        xm = jnp.pad(xm, ((0, Mp - M), (0, 0)))

    wb, bb, wh, bh = params["wb"], params["bb"], params["wh"], params["bh"]
    featp = wb.shape[1]
    coutp = wh.shape[1]

    out = pl.pallas_call(
        _fused_base_heads_kernel,
        out_shape=jax.ShapeDtypeStruct((Mp, coutp), jnp.float32),
        grid=(steps,),
        in_specs=[
            pl.BlockSpec((tm, Cin), lambda i: (i, 0)),
            pl.BlockSpec((Cin, featp), lambda i: (0, 0)),
            pl.BlockSpec((1, featp), lambda i: (0, 0)),
            pl.BlockSpec((featp, coutp), lambda i: (0, 0)),
            pl.BlockSpec((1, coutp), lambda i: (0, 0)),
        ],
        out_specs=pl.BlockSpec((tm, coutp), lambda i: (i, 0)),
        compiler_params=pltpu.CompilerParams(
            dimension_semantics=("parallel",),
            vmem_limit_bytes=_VMEM_LIMIT),
    )(xm, wb, bb, wh, bh)

    return out[:M].reshape(B, H, W, coutp)


def _merge_constants(head_specs, logb_component_indices, stride, cp):
    """Confidence-selection matrix E (Cp, Cp) and per-channel (scale, add) rows
    for the combined (both heads) 128-lane slab."""
    log_s = math.log(float(stride))
    emat = np.zeros((cp, cp), np.float32)
    scale = np.ones((1, cp), np.float32)
    add = np.zeros((1, cp), np.float32)

    base = 0
    for spec, lci in zip(head_specs, logb_component_indices):
        off = base
        for ci, (K, is_vec) in enumerate(spec):
            if ci == 0:
                sc, ad = 0.5, 0.0
            elif ci in lci:
                sc, ad = 1.0, log_s          # log(exp(x) * s) == x + log(s)
            else:
                sc, ad = float(stride), 0.0
            width = 2 * K if is_vec else K
            for j in range(width):
                c = off + j
                k = (j // 2) if is_vec else j        # both vector halves share conf k
                emat[base + k, c] = 1.0              # global conf channel of this head
                scale[0, c] = sc
                add[0, c] = ad
            off += width
        base = off
    return jnp.asarray(emat), jnp.asarray(scale), jnp.asarray(add)


def merge_all_heads(orig_slab, red_slab, head_specs, logb_component_indices,
                    stride):
    """Merge the reduced-resolution slab into the original one, BOTH heads at
    once, directly on the 128-lane padded slabs.

    orig_slab: (B, H, W, Cp) channels-last f32 (full resolution, padded lanes 0)
    red_slab:  (B, Hr, Wr, Cp)
    Returns the merged (B, H, W, Cp) slab.
    """
    B, H, W, Cp = orig_slab.shape
    _, Hr, Wr, _ = red_slab.shape
    s = int(stride)

    orig_strided = orig_slab[:, :s * Hr:s, :s * Wr:s, :]    # (B, Hr, Wr, Cp)

    emat, scale_row, add_row = _merge_constants(
        head_specs, logb_component_indices, s, Cp)

    N = B * Hr * Wr
    tr, Np, steps = _choose_tiles(N)

    def prep(a):
        a = a.reshape(N, Cp)
        if Np != N:
            a = jnp.pad(a, ((0, Np - N), (0, 0)))
        return a

    merged = pl.pallas_call(
        _merge_kernel,
        out_shape=jax.ShapeDtypeStruct((Np, Cp), jnp.float32),
        grid=(steps,),
        in_specs=[
            pl.BlockSpec((tr, Cp), lambda i: (i, 0)),
            pl.BlockSpec((tr, Cp), lambda i: (i, 0)),
            pl.BlockSpec((Cp, Cp), lambda i: (0, 0)),
            pl.BlockSpec((1, Cp), lambda i: (0, 0)),
            pl.BlockSpec((1, Cp), lambda i: (0, 0)),
        ],
        out_specs=pl.BlockSpec((tr, Cp), lambda i: (i, 0)),
        compiler_params=pltpu.CompilerParams(
            dimension_semantics=("parallel",),
            vmem_limit_bytes=_VMEM_LIMIT),
    )(prep(red_slab), prep(orig_strided), emat, scale_row, add_row)

    merged = merged[:N].reshape(B, Hr, Wr, Cp)
    # TODO(synk): the strided scatter back into the full-resolution slab stays
    # in plain JAX (.at[...].set); no clean Pallas equivalent for this
    # non-contiguous write pattern.
    return orig_slab.at[:, :s * Hr:s, :s * Wr:s, :].set(merged)


def split_components(slab, spec):
    """(B, H, W, C) channels-last slab -> list of NCHW components (PyTorch-style)."""
    B, H, W, _ = slab.shape
    comps, off = [], 0
    for K, is_vec in spec:
        c = 2 * K if is_vec else K
        comp = jnp.transpose(slab[..., off:off + c], (0, 3, 1, 2))
        if is_vec:
            comp = comp.reshape(B, K, 2, H, W)
        comps.append(comp)
        off += c
    return comps


# ----------------------------------------------------------------------------
# Shell2Scale forward (functional)
# ----------------------------------------------------------------------------
def shell2scale_forward(x, params, head_specs, reduced_stride=3):
    s = int(reduced_stride)
    logb_component_indices = [(2,), (3, 4)]

    x_nhwc = jnp.transpose(x, (0, 2, 3, 1))          # channels-last, once
    xr_nhwc = x_nhwc[:, ::s, ::s, :]

    orig_slab = fused_base_heads(x_nhwc, params)      # (B, H, W, Coutp)
    red_slab = fused_base_heads(xr_nhwc, params)      # (B, Hr, Wr, Coutp)

    merged_slab = merge_all_heads(orig_slab, red_slab, head_specs,
                                  logb_component_indices, s)

    heads_out, off = [], 0
    for spec in head_specs:
        ctot = sum(2 * K if v else K for K, v in spec)
        heads_out.append(split_components(merged_slab[..., off:off + ctot], spec))
        off += ctot
    return heads_out


# ----------------------------------------------------------------------------
# Deterministic parameter construction + demo run
# ----------------------------------------------------------------------------
def make_params(key, cin, feat, head_specs):
    def total_channels(spec):
        return sum(2 * K if is_vec else K for K, is_vec in spec)

    ctots = [total_channels(spec) for spec in head_specs]
    cout_total = sum(ctots)
    featp = _round_up(feat, LANE)
    coutp = _round_up(cout_total, LANE)

    keys = jax.random.split(key, 2 + 2 * len(head_specs))
    wb = jnp.zeros((cin, featp), jnp.float32)
    wb = wb.at[:, :feat].set(
        0.1 * jax.random.normal(keys[0], (cin, feat), jnp.float32))
    bb = jnp.zeros((1, featp), jnp.float32)
    bb = bb.at[:, :feat].set(
        0.1 * jax.random.normal(keys[1], (1, feat), jnp.float32))

    wh = jnp.zeros((featp, coutp), jnp.float32)
    bh = jnp.zeros((1, coutp), jnp.float32)
    off = 0
    for i, c in enumerate(ctots):
        wh = wh.at[:feat, off:off + c].set(
            0.1 * jax.random.normal(keys[2 + 2 * i], (feat, c), jnp.float32))
        bh = bh.at[:, off:off + c].set(
            0.1 * jax.random.normal(keys[3 + 2 * i], (1, c), jnp.float32))
        off += c
    # Weights feeding the MXU are stored in bf16; biases stay f32.
    return {"wb": wb.astype(jnp.bfloat16), "bb": bb,
            "wh": wh.astype(jnp.bfloat16), "bh": bh}


if __name__ == "__main__":
    key = jax.random.PRNGKey(0)
    k_in, k_p = jax.random.split(key)

    B, Cin, H, W = 2, 3, 18, 18          # 18 divisible by reduced_stride=3
    FEAT = 32
    reduced_stride = 3

    # head 1 (PIF-like):  confidence, vector(5D output), logb, scale
    head1_spec = [(4, False), (4, True), (4, False), (4, False)]
    # head 2 (PAF-like):  confidence, vec1(5D), vec2(5D), logb1, logb2
    head2_spec = [(3, False), (3, True), (3, True), (3, False), (3, False)]
    head_specs = [head1_spec, head2_spec]

    x = jax.random.normal(k_in, (B, Cin, H, W), jnp.float32)
    params = make_params(k_p, Cin, FEAT, head_specs)

    fwd = jax.jit(functools.partial(shell2scale_forward,
                                    head_specs=head_specs,
                                    reduced_stride=reduced_stride))
    heads = fwd(x, params)

    ok = True
    for h in heads:
        for comp in h:
            comp = jax.block_until_ready(comp)
            ok = ok and bool(jnp.all(jnp.isfinite(comp)))
    assert ok

    print("KERNEL_OK")
</pallas_src>

<mosaic_0001>
module attributes {stable_mosaic.version = 11 : i64} {
  func.func @_fused_base_heads_kernel(%arg0: i32, %arg1: memref<336x3xbf16, #tpu.memory_space<vmem>>, %arg2: memref<3x128xbf16, #tpu.memory_space<vmem>>, %arg3: memref<1x128xf32, #tpu.memory_space<vmem>>, %arg4: memref<128x128xbf16, #tpu.memory_space<vmem>>, %arg5: memref<1x128xf32, #tpu.memory_space<vmem>>, %arg6: memref<336x128xf32, #tpu.memory_space<vmem>>) attributes {dimension_semantics = [#tpu.dimension_semantics<parallel>], iteration_bounds = array<i64: 2>, scalar_prefetch = 0 : i64, scratch_operands = 0 : i64, tpu.core_type = #tpu.core_type<tc>, window_params = [{transform_indices = @transform_0, window_bounds = array<i64: 336, 3>}, {pipeline_mode = #tpu.pipeline_mode<synchronous>, transform_indices = @transform_1, window_bounds = array<i64: 3, 128>}, {pipeline_mode = #tpu.pipeline_mode<synchronous>, transform_indices = @transform_2, window_bounds = array<i64: 1, 128>}, {pipeline_mode = #tpu.pipeline_mode<synchronous>, transform_indices = @transform_3, window_bounds = array<i64: 128, 128>}, {pipeline_mode = #tpu.pipeline_mode<synchronous>, transform_indices = @transform_4, window_bounds = array<i64: 1, 128>}, {transform_indices = @transform_5, window_bounds = array<i64: 336, 128>}]} {
    %c0 = arith.constant 0 : index
    %c0_0 = arith.constant 0 : index
    %0 = vector.load %arg1[%c0, %c0_0] : memref<336x3xbf16, #tpu.memory_space<vmem>>, vector<336x3xbf16>
    %c0_1 = arith.constant 0 : index
    %c0_2 = arith.constant 0 : index
    %1 = vector.load %arg2[%c0_1, %c0_2] : memref<3x128xbf16, #tpu.memory_space<vmem>>, vector<3x128xbf16>
    %cst = arith.constant dense<0.000000e+00> : vector<336x128xf32>
    %2 = tpu.matmul %0, %1, %cst {dimension_numbers = #tpu.dot_dimension_numbers<[1], [0], [0], [1], [0, 0, 1, 1], [], []>} : vector<336x3xbf16>, vector<3x128xbf16>, vector<336x128xf32> -> vector<336x128xf32>
    %c0_3 = arith.constant 0 : index
    %c0_4 = arith.constant 0 : index
    %3 = vector.load %arg3[%c0_3, %c0_4] : memref<1x128xf32, #tpu.memory_space<vmem>>, vector<1x128xf32>
    %4 = vector.broadcast %3 : vector<1x128xf32> to vector<336x128xf32>
    %5 = arith.addf %2, %4 : vector<336x128xf32>
    %cst_5 = arith.constant 0.000000e+00 : f32
    %6 = vector.broadcast %cst_5 : f32 to vector<336x128xf32>
    %7 = arith.maximumf %5, %6 : vector<336x128xf32>
    %8 = arith.truncf %7 : vector<336x128xf32> to vector<336x128xbf16>
    %c0_6 = arith.constant 0 : index
    %c0_7 = arith.constant 0 : index
    %9 = vector.load %arg4[%c0_6, %c0_7] : memref<128x128xbf16, #tpu.memory_space<vmem>>, vector<128x128xbf16>
    %cst_8 = arith.constant dense<0.000000e+00> : vector<336x128xf32>
    %10 = tpu.matmul %8, %9, %cst_8 {dimension_numbers = #tpu.dot_dimension_numbers<[1], [0], [0], [1], [0, 0, 1, 1], [], []>} : vector<336x128xbf16>, vector<128x128xbf16>, vector<336x128xf32> -> vector<336x128xf32>
    %c0_9 = arith.constant 0 : index
    %c0_10 = arith.constant 0 : index
    %11 = vector.load %arg5[%c0_9, %c0_10] : memref<1x128xf32, #tpu.memory_space<vmem>>, vector<1x128xf32>
    %12 = vector.broadcast %11 : vector<1x128xf32> to vector<336x128xf32>
    %13 = arith.addf %10, %12 : vector<336x128xf32>
    %c0_11 = arith.constant 0 : index
    %c0_12 = arith.constant 0 : index
    %14 = vector.load %arg6[%c0_11, %c0_12] : memref<336x128xf32, #tpu.memory_space<vmem>>, vector<336x128xf32>
    tpu.vector_store %arg6[%c0_11, %c0_12], %13 {strides = array<i32>} : memref<336x128xf32, #tpu.memory_space<vmem>>, vector<336x128xf32>,
    return
  }
  func.func @transform_0(%arg0: i32) -> (i32, i32) {
    %c0_i32 = arith.constant 0 : i32
    %c0_i32_0 = arith.constant 0 : i32
    return %arg0, %c0_i32 : i32, i32
  }
  func.func @transform_1(%arg0: i32) -> (i32, i32) {
    %c0_i32 = arith.constant 0 : i32
    %c0_i32_0 = arith.constant 0 : i32
    %c0_i32_1 = arith.constant 0 : i32
    return %c0_i32, %c0_i32_0 : i32, i32
  }
  func.func @transform_2(%arg0: i32) -> (i32, i32) {
    %c0_i32 = arith.constant 0 : i32
    %c0_i32_0 = arith.constant 0 : i32
    %c0_i32_1 = arith.constant 0 : i32
    return %c0_i32, %c0_i32_0 : i32, i32
  }
  func.func @transform_3(%arg0: i32) -> (i32, i32) {
    %c0_i32 = arith.constant 0 : i32
    %c0_i32_0 = arith.constant 0 : i32
    %c0_i32_1 = arith.constant 0 : i32
    return %c0_i32, %c0_i32_0 : i32, i32
  }
  func.func @transform_4(%arg0: i32) -> (i32, i32) {
    %c0_i32 = arith.constant 0 : i32
    %c0_i32_0 = arith.constant 0 : i32
    %c0_i32_1 = arith.constant 0 : i32
    return %c0_i32, %c0_i32_0 : i32, i32
  }
  func.func @transform_5(%arg0: i32) -> (i32, i32) {
    %c0_i32 = arith.constant 0 : i32
    %c0_i32_0 = arith.constant 0 : i32
    return %arg0, %c0_i32 : i32, i32
  }
}

module attributes {stable_mosaic.version = 11 : i64} {
  func.func @_fused_base_heads_kernel(%arg0: i32, %arg1: memref<48x3xbf16, #tpu.memory_space<vmem>>, %arg2: memref<3x128xbf16, #tpu.memory_space<vmem>>, %arg3: memref<1x128xf32, #tpu.memory_space<vmem>>, %arg4: memref<128x128xbf16, #tpu.memory_space<vmem>>, %arg5: memref<1x128xf32, #tpu.memory_space<vmem>>, %arg6: memref<48x128xf32, #tpu.memory_space<vmem>>) attributes {dimension_semantics = [#tpu.dimension_semantics<parallel>], iteration_bounds = array<i64: 2>, scalar_prefetch = 0 : i64, scratch_operands = 0 : i64, tpu.core_type = #tpu.core_type<tc>, window_params = [{transform_indices = @transform_0, window_bounds = array<i64: 48, 3>}, {pipeline_mode = #tpu.pipeline_mode<synchronous>, transform_indices = @transform_1, window_bounds = array<i64: 3, 128>}, {pipeline_mode = #tpu.pipeline_mode<synchronous>, transform_indices = @transform_2, window_bounds = array<i64: 1, 128>}, {pipeline_mode = #tpu.pipeline_mode<synchronous>, transform_indices = @transform_3, window_bounds = array<i64: 128, 128>}, {pipeline_mode = #tpu.pipeline_mode<synchronous>, transform_indices = @transform_4, window_bounds = array<i64: 1, 128>}, {transform_indices = @transform_5, window_bounds = array<i64: 48, 128>}]} {
    %c0 = arith.constant 0 : index
    %c0_0 = arith.constant 0 : index
    %0 = vector.load %arg1[%c0, %c0_0] : memref<48x3xbf16, #tpu.memory_space<vmem>>, vector<48x3xbf16>
    %c0_1 = arith.constant 0 : index
    %c0_2 = arith.constant 0 : index
    %1 = vector.load %arg2[%c0_1, %c0_2] : memref<3x128xbf16, #tpu.memory_space<vmem>>, vector<3x128xbf16>
    %cst = arith.constant dense<0.000000e+00> : vector<48x128xf32>
    %2 = tpu.matmul %0, %1, %cst {dimension_numbers = #tpu.dot_dimension_numbers<[1], [0], [0], [1], [0, 0, 1, 1], [], []>} : vector<48x3xbf16>, vector<3x128xbf16>, vector<48x128xf32> -> vector<48x128xf32>
    %c0_3 = arith.constant 0 : index
    %c0_4 = arith.constant 0 : index
    %3 = vector.load %arg3[%c0_3, %c0_4] : memref<1x128xf32, #tpu.memory_space<vmem>>, vector<1x128xf32>
    %4 = vector.broadcast %3 : vector<1x128xf32> to vector<48x128xf32>
    %5 = arith.addf %2, %4 : vector<48x128xf32>
    %cst_5 = arith.constant 0.000000e+00 : f32
    %6 = vector.broadcast %cst_5 : f32 to vector<48x128xf32>
    %7 = arith.maximumf %5, %6 : vector<48x128xf32>
    %8 = arith.truncf %7 : vector<48x128xf32> to vector<48x128xbf16>
    %c0_6 = arith.constant 0 : index
    %c0_7 = arith.constant 0 : index
    %9 = vector.load %arg4[%c0_6, %c0_7] : memref<128x128xbf16, #tpu.memory_space<vmem>>, vector<128x128xbf16>
    %cst_8 = arith.constant dense<0.000000e+00> : vector<48x128xf32>
    %10 = tpu.matmul %8, %9, %cst_8 {dimension_numbers = #tpu.dot_dimension_numbers<[1], [0], [0], [1], [0, 0, 1, 1], [], []>} : vector<48x128xbf16>, vector<128x128xbf16>, vector<48x128xf32> -> vector<48x128xf32>
    %c0_9 = arith.constant 0 : index
    %c0_10 = arith.constant 0 : index
    %11 = vector.load %arg5[%c0_9, %c0_10] : memref<1x128xf32, #tpu.memory_space<vmem>>, vector<1x128xf32>
    %12 = vector.broadcast %11 : vector<1x128xf32> to vector<48x128xf32>
    %13 = arith.addf %10, %12 : vector<48x128xf32>
    %c0_11 = arith.constant 0 : index
    %c0_12 = arith.constant 0 : index
    %14 = vector.load %arg6[%c0_11, %c0_12] : memref<48x128xf32, #tpu.memory_space<vmem>>, vector<48x128xf32>
    tpu.vector_store %arg6[%c0_11, %c0_12], %13 {strides = array<i32>} : memref<48x128xf32, #tpu.memory_space<vmem>>, vector<48x128xf32>,
    return
  }
  func.func @transform_0(%arg0: i32) -> (i32, i32) {
    %c0_i32 = arith.constant 0 : i32
    %c0_i32_0 = arith.constant 0 : i32
    return %arg0, %c0_i32 : i32, i32
  }
  func.func @transform_1(%arg0: i32) -> (i32, i32) {
    %c0_i32 = arith.constant 0 : i32
    %c0_i32_0 = arith.constant 0 : i32
    %c0_i32_1 = arith.constant 0 : i32
    return %c0_i32, %c0_i32_0 : i32, i32
  }
  func.func @transform_2(%arg0: i32) -> (i32, i32) {
    %c0_i32 = arith.constant 0 : i32
    %c0_i32_0 = arith.constant 0 : i32
    %c0_i32_1 = arith.constant 0 : i32
    return %c0_i32, %c0_i32_0 : i32, i32
  }
  func.func @transform_3(%arg0: i32) -> (i32, i32) {
    %c0_i32 = arith.constant 0 : i32
    %c0_i32_0 = arith.constant 0 : i32
    %c0_i32_1 = arith.constant 0 : i32
    return %c0_i32, %c0_i32_0 : i32, i32
  }
  func.func @transform_4(%arg0: i32) -> (i32, i32) {
    %c0_i32 = arith.constant 0 : i32
    %c0_i32_0 = arith.constant 0 : i32
    %c0_i32_1 = arith.constant 0 : i32
    return %c0_i32, %c0_i32_0 : i32, i32
  }
  func.func @transform_5(%arg0: i32) -> (i32, i32) {
    %c0_i32 = arith.constant 0 : i32
    %c0_i32_0 = arith.constant 0 : i32
    return %arg0, %c0_i32 : i32, i32
  }
}

module attributes {stable_mosaic.version = 11 : i64} {
  func.func @_merge_kernel(%arg0: i32, %arg1: memref<48x128xf32, #tpu.memory_space<vmem>>, %arg2: memref<48x128xf32, #tpu.memory_space<vmem>>, %arg3: memref<128x128xf32, #tpu.memory_space<vmem>>, %arg4: memref<1x128xf32, #tpu.memory_space<vmem>>, %arg5: memref<1x128xf32, #tpu.memory_space<vmem>>, %arg6: memref<48x128xf32, #tpu.memory_space<vmem>>) attributes {dimension_semantics = [#tpu.dimension_semantics<parallel>], iteration_bounds = array<i64: 2>, scalar_prefetch = 0 : i64, scratch_operands = 0 : i64, tpu.core_type = #tpu.core_type<tc>, window_params = [{transform_indices = @transform_0, window_bounds = array<i64: 48, 128>}, {transform_indices = @transform_1, window_bounds = array<i64: 48, 128>}, {pipeline_mode = #tpu.pipeline_mode<synchronous>, transform_indices = @transform_2, window_bounds = array<i64: 128, 128>}, {pipeline_mode = #tpu.pipeline_mode<synchronous>, transform_indices = @transform_3, window_bounds = array<i64: 1, 128>}, {pipeline_mode = #tpu.pipeline_mode<synchronous>, transform_indices = @transform_4, window_bounds = array<i64: 1, 128>}, {transform_indices = @transform_5, window_bounds = array<i64: 48, 128>}]} {
    %c0 = arith.constant 0 : index
    %c0_0 = arith.constant 0 : index
    %0 = vector.load %arg1[%c0, %c0_0] : memref<48x128xf32, #tpu.memory_space<vmem>>, vector<48x128xf32>
    %c0_1 = arith.constant 0 : index
    %c0_2 = arith.constant 0 : index
    %1 = vector.load %arg2[%c0_1, %c0_2] : memref<48x128xf32, #tpu.memory_space<vmem>>, vector<48x128xf32>
    %2 = arith.cmpf ogt, %0, %1 : vector<48x128xf32>
    %3 = arith.extui %2 : vector<48x128xi1> to vector<48x128xi32>
    %4 = arith.sitofp %3 : vector<48x128xi32> to vector<48x128xf32>
    %c0_3 = arith.constant 0 : index
    %c0_4 = arith.constant 0 : index
    %5 = vector.load %arg3[%c0_3, %c0_4] : memref<128x128xf32, #tpu.memory_space<vmem>>, vector<128x128xf32>
    %cst = arith.constant dense<0.000000e+00> : vector<48x128xf32>
    %6 = tpu.matmul %4, %5, %cst {dimension_numbers = #tpu.dot_dimension_numbers<[1], [0], [0], [1], [0, 0, 1, 1], [], []>} : vector<48x128xf32>, vector<128x128xf32>, vector<48x128xf32> -> vector<48x128xf32>
    %cst_5 = arith.constant 5.000000e-01 : f32
    %7 = vector.broadcast %cst_5 : f32 to vector<48x128xf32>
    %8 = arith.cmpf ogt, %6, %7 : vector<48x128xf32>
    %c0_6 = arith.constant 0 : index
    %c0_7 = arith.constant 0 : index
    %9 = vector.load %arg4[%c0_6, %c0_7] : memref<1x128xf32, #tpu.memory_space<vmem>>, vector<1x128xf32>
    %10 = vector.broadcast %9 : vector<1x128xf32> to vector<48x128xf32>
    %11 = arith.mulf %0, %10 : vector<48x128xf32>
    %c0_8 = arith.constant 0 : index
    %c0_9 = arith.constant 0 : index
    %12 = vector.load %arg5[%c0_8, %c0_9] : memref<1x128xf32, #tpu.memory_space<vmem>>, vector<1x128xf32>
    %13 = vector.broadcast %12 : vector<1x128xf32> to vector<48x128xf32>
    %14 = arith.addf %11, %13 : vector<48x128xf32>
    %15 = arith.select %8, %14, %1 : vector<48x128xi1>, vector<48x128xf32>
    %c0_10 = arith.constant 0 : index
    %c0_11 = arith.constant 0 : index
    %16 = vector.load %arg6[%c0_10, %c0_11] : memref<48x128xf32, #tpu.memory_space<vmem>>, vector<48x128xf32>
    tpu.vector_store %arg6[%c0_10, %c0_11], %15 {strides = array<i32>} : memref<48x128xf32, #tpu.memory_space<vmem>>, vector<48x128xf32>,
    return
  }
  func.func @transform_0(%arg0: i32) -> (i32, i32) {
    %c0_i32 = arith.constant 0 : i32
    %c0_i32_0 = arith.constant 0 : i32
    return %arg0, %c0_i32 : i32, i32
  }
  func.func @transform_1(%arg0: i32) -> (i32, i32) {
    %c0_i32 = arith.constant 0 : i32
    %c0_i32_0 = arith.constant 0 : i32
    return %arg0, %c0_i32 : i32, i32
  }
  func.func @transform_2(%arg0: i32) -> (i32, i32) {
    %c0_i32 = arith.constant 0 : i32
    %c0_i32_0 = arith.constant 0 : i32
    %c0_i32_1 = arith.constant 0 : i32
    return %c0_i32, %c0_i32_0 : i32, i32
  }
  func.func @transform_3(%arg0: i32) -> (i32, i32) {
    %c0_i32 = arith.constant 0 : i32
    %c0_i32_0 = arith.constant 0 : i32
    %c0_i32_1 = arith.constant 0 : i32
    return %c0_i32, %c0_i32_0 : i32, i32
  }
  func.func @transform_4(%arg0: i32) -> (i32, i32) {
    %c0_i32 = arith.constant 0 : i32
    %c0_i32_0 = arith.constant 0 : i32
    %c0_i32_1 = arith.constant 0 : i32
    return %c0_i32, %c0_i32_0 : i32, i32
  }
  func.func @transform_5(%arg0: i32) -> (i32, i32) {
    %c0_i32 = arith.constant 0 : i32
    %c0_i32_0 = arith.constant 0 : i32
    return %arg0, %c0_i32 : i32, i32
  }
}

</mosaic_0001>

<llo_original>
// kernel: shell2scale_forward.4
$region0: #{shell2scale_forward.4}
  #allocation0 [shape = 'u32[]', space=smem, size = 0x4, offset = 0x4, fixed_abs, tag = 'smem constant byte address 0x4 - core index']
  #allocation1 [shape = 'u32[72,128]{1,0:T(1,128)}', space=vmem, size = 0x9000, scoped, tag = 'internal scratch']
  %s0 = inlined_call_operand.vmem [shape: bf16[96,3], index: 0, kind: input, shape index: {}]
  %s1 = inlined_call_operand.vmem [shape: bf16[3,128], index: 1, kind: input, shape index: {}]
  %s2 = inlined_call_operand.vmem [shape: f32[1,128], index: 2, kind: input, shape index: {}]
  %s3 = inlined_call_operand.vmem [shape: bf16[128,128], index: 3, kind: input, shape index: {}]
  %s4 = inlined_call_operand.vmem [shape: f32[1,128], index: 4, kind: input, shape index: {}]
  %s5 = inlined_call_operand.vmem [shape: f32[96,128], index: 5, kind: output, shape index: {}]
  %s6 = sld [smem:[#allocation0]]
  $region53: #{shell2scale_forward.4} parent=0
    _
  %s8 = ssub.s32 1, %s6
  %s9 = scalar_select 0, %s8, %s6
  loop: start=0, step=1, limit=4
  $region2: #{shell2scale_forward.4} parent=0 // loop_pre_header
    _
  $region3: #{shell2scale_forward.4} parent=0 // loop_header
    %s11 = sphi 0, %s15
    %p12 = scmp.ge.s32.totalorder %s11, 4
    %s21 = sphi 0, %s23
    %s24 = sphi 0, %s21
    %s25 = sphi 0, %s24
    %s41 = sphi 0, %s25
    %s45 = sphi 0, %s45
    %s47 = sphi 0, %s45
    %s48 = sphi 0, %s47
    %s62 = sphi 0, %s48
    %s66 = sphi 0, %s66
    %s68 = sphi 0, %s66
    %s69 = sphi 0, %s68
    %s83 = sphi 0, %s69
    %s87 = sphi 0, %s87
    %s89 = sphi 0, %s87
    %s90 = sphi 0, %s89
    %s104 = sphi 0, %s90
    %s108 = sphi 0, %s108
    %s110 = sphi 0, %s108
    %s111 = sphi 0, %s110
    %s125 = sphi 0, %s111
    %s131 = sphi 0, %s133
    %s134 = sphi 0, %s131
    %s135 = sphi 0, %s134
    %s151 = sphi 0, %s135
  $region4: #{shell2scale_forward.4} parent=0 // loop_header_branch
    %14 = sbr.rel (%p12) target = $region8
  $region5: #{shell2scale_forward.4} parent=0 // loop_body
    %s16 = ssub.s32 %s11, 1
    %s17 = ssub.s32 %s11, 2
    %s18 = sadd.s32 %s11, 1
    %s19 = ssub.s32 %s11, %s18
    %p20 = scmp.eq.s32.totalorder %s19, 0
    %s22 = sadd.s32 %s21, 1
    %s23 = scalar_select %p20, %s21, %s22
    %p26 = pneg %p20
    %p27 = scmp.eq.s32.totalorder %s11, 1
    %p28 = por %p26, %p27
    %p29 = scmp.ne.s32.totalorder %s21, %s24
    %p30 = scmp.eq.s32.totalorder %s11, 0
    %p31 = por %p29, %p30
    %p32 = scmp.ne.s32.totalorder %s21, %s24
    %p33 = scmp.eq.s32.totalorder %s16, 1
    %p34 = por %p32, %p33
    %p35 = scmp.ne.s32.totalorder %s24, %s25
    %p36 = scmp.eq.s32.totalorder %s16, 0
    %p37 = por %p35, %p36
    %p38 = scmp.ne.s32.totalorder %s24, %s25
    %p39 = scmp.eq.s32.totalorder %s17, 1
    %p40 = por %p38, %p39
    %p42 = scmp.ne.s32.totalorder %s25, %s41
    %p43 = scmp.eq.s32.totalorder %s17, 0
    %p44 = por %p42, %p43
    %s46 = sadd.s32 %s45, 1
    %p49 = scmp.eq.s32.totalorder %s11, 1
    %p50 = scmp.ne.s32.totalorder %s45, %s47
    %p51 = scmp.eq.s32.totalorder %s11, 0
    %p52 = por %p50, %p51
    %p53 = scmp.ne.s32.totalorder %s45, %s47
    %p54 = scmp.eq.s32.totalorder %s16, 1
    %p55 = por %p53, %p54
    %p56 = scmp.ne.s32.totalorder %s47, %s48
    %p57 = scmp.eq.s32.totalorder %s16, 0
    %p58 = por %p56, %p57
    %p59 = scmp.ne.s32.totalorder %s47, %s48
    %p60 = scmp.eq.s32.totalorder %s17, 1
    %p61 = por %p59, %p60
    %p63 = scmp.ne.s32.totalorder %s48, %s62
    %p64 = scmp.eq.s32.totalorder %s17, 0
    %p65 = por %p63, %p64
    %s67 = sadd.s32 %s66, 1
    %p70 = scmp.eq.s32.totalorder %s11, 1
    %p71 = scmp.ne.s32.totalorder %s66, %s68
    %p72 = scmp.eq.s32.totalorder %s11, 0
    %p73 = por %p71, %p72
    %p74 = scmp.ne.s32.totalorder %s66, %s68
    %p75 = scmp.eq.s32.totalorder %s16, 1
    %p76 = por %p74, %p75
    %p77 = scmp.ne.s32.totalorder %s68, %s69
    %p78 = scmp.eq.s32.totalorder %s16, 0
    %p79 = por %p77, %p78
    %p80 = scmp.ne.s32.totalorder %s68, %s69
    %p81 = scmp.eq.s32.totalorder %s17, 1
    %p82 = por %p80, %p81
    %p84 = scmp.ne.s32.totalorder %s69, %s83
    %p85 = scmp.eq.s32.totalorder %s17, 0
    %p86 = por %p84, %p85
    %s88 = sadd.s32 %s87, 1
    %p91 = scmp.eq.s32.totalorder %s11, 1
    %p92 = scmp.ne.s32.totalorder %s87, %s89
    %p93 = scmp.eq.s32.totalorder %s11, 0
    %p94 = por %p92, %p93
    %p95 = scmp.ne.s32.totalorder %s87, %s89
    %p96 = scmp.eq.s32.totalorder %s16, 1
    %p97 = por %p95, %p96
    %p98 = scmp.ne.s32.totalorder %s89, %s90
    %p99 = scmp.eq.s32.totalorder %s16, 0
    %p100 = por %p98, %p99
    %p101 = scmp.ne.s32.totalorder %s89, %s90
    %p102 = scmp.eq.s32.totalorder %s17, 1
    %p103 = por %p101, %p102
    %p105 = scmp.ne.s32.totalorder %s90, %s104
    %p106 = scmp.eq.s32.totalorder %s17, 0
    %p107 = por %p105, %p106
    %s109 = sadd.s32 %s108, 1
    %p112 = scmp.eq.s32.totalorder %s11, 1
    %p113 = scmp.ne.s32.totalorder %s108, %s110
    %p114 = scmp.eq.s32.totalorder %s11, 0
    %p115 = por %p113, %p114
    %p116 = scmp.ne.s32.totalorder %s108, %s110
    %p117 = scmp.eq.s32.totalorder %s16, 1
    %p118 = por %p116, %p117
    %p119 = scmp.ne.s32.totalorder %s110, %s111
    %p120 = scmp.eq.s32.totalorder %s16, 0
    %p121 = por %p119, %p120
    %p122 = scmp.ne.s32.totalorder %s110, %s111
    %p123 = scmp.eq.s32.totalorder %s17, 1
    %p124 = por %p122, %p123
    %p126 = scmp.ne.s32.totalorder %s111, %s125
    %p127 = scmp.eq.s32.totalorder %s17, 0
    %p128 = por %p126, %p127
    %s129 = ssub.s32 %s11, %s18
    %p130 = scmp.eq.s32.totalorder %s129, 0
    %s132 = sadd.s32 %s131, 1
    %s133 = scalar_select %p130, %s131, %s132
    %p136 = pneg %p130
    %p137 = scmp.eq.s32.totalorder %s11, 1
    %p138 = por %p136, %p137
    %p139 = scmp.ne.s32.totalorder %s131, %s134
    %p140 = scmp.eq.s32.totalorder %s11, 0
    %p141 = por %p139, %p140
    %p142 = scmp.ne.s32.totalorder %s131, %s134
    %p143 = scmp.eq.s32.totalorder %s16, 1
    %p144 = por %p142, %p143
    %p145 = scmp.ne.s32.totalorder %s134, %s135
    %p146 = scmp.eq.s32.totalorder %s16, 0
    %p147 = por %p145, %p146
    %p148 = scmp.ne.s32.totalorder %s134, %s135
    %p149 = scmp.eq.s32.totalorder %s17, 1
    %p150 = por %p148, %p149
    %p152 = scmp.ne.s32.totalorder %s135, %s151
    %p153 = scmp.eq.s32.totalorder %s17, 0
    %p154 = por %p152, %p153
    %p155 = scmp.le.s32.totalorder 1, %s11
    %p156 = scmp.lt.s32.totalorder %s11, 3
    %p157 = pnand %p155, %p156
    %p158 = pneg %p157
    // Predicated region
    $region9: #{shell2scale_forward.4} parent=5 // pred_check
      _
    $region10: #{shell2scale_forward.4} parent=5 // pred_check_branch
      %160 = sbr.rel (%p157) target = $region12
    $region11: #{shell2scale_forward.4} parent=5 // pred_region
      %s161 = ssub.s32 %s11, 1
      // Predicated region
      $region13: #{shell2scale_forward.4} parent=11 // pred_check
        %p162 = pneg %p58
      $region14: #{shell2scale_forward.4} parent=11 // pred_check_branch
        %164 = sbr.rel (%p162) target = $region16
      $region15: #{shell2scale_forward.4} parent=11 // pred_region
        _
      $region16: #{shell2scale_forward.4} parent=11 // pred_fallthru
        _
      // Predicated region
      $region17: #{shell2scale_forward.4} parent=11 // pred_check
        %p165 = pneg %p79
      $region18: #{shell2scale_forward.4} parent=11 // pred_check_branch
        %167 = sbr.rel (%p165) target = $region20
      $region19: #{shell2scale_forward.4} parent=11 // pred_region
        _
      $region20: #{shell2scale_forward.4} parent=11 // pred_fallthru
        _
      // Predicated region
      $region21: #{shell2scale_forward.4} parent=11 // pred_check
        %p168 = pneg %p100
      $region22: #{shell2scale_forward.4} parent=11 // pred_check_branch
        %170 = sbr.rel (%p168) target = $region24
      $region23: #{shell2scale_forward.4} parent=11 // pred_region
        _
      $region24: #{shell2scale_forward.4} parent=11 // pred_fallthru
        _
      // Predicated region
      $region25: #{shell2scale_forward.4} parent=11 // pred_check
        %p171 = pneg %p121
      $region26: #{shell2scale_forward.4} parent=11 // pred_check_branch
        %173 = sbr.rel (%p171) target = $region28
      $region27: #{shell2scale_forward.4} parent=11 // pred_region
        _
      $region28: #{shell2scale_forward.4} parent=11 // pred_fallthru
        _
    $region12: #{shell2scale_forward.4} parent=5 // pred_fallthru
      _
    %p174 = scmp.lt.s32.totalorder %s11, 2
    // Predicated region
    $region29: #{shell2scale_forward.4} parent=5 // pred_check
      %p175 = pneg %p174
    $region30: #{shell2scale_forward.4} parent=5 // pred_check_branch
      %177 = sbr.rel (%p175) target = $region32
    $region31: #{shell2scale_forward.4} parent=5 // pred_region
      // Predicated region
      $region33: #{shell2scale_forward.4} parent=31 // pred_check
        %p178 = pneg %p31
      $region34: #{shell2scale_forward.4} parent=31 // pred_check_branch
        %180 = sbr.rel (%p178) target = $region36
      $region35: #{shell2scale_forward.4} parent=31 // pred_region
        %s181 = smul.u32 6, %s11
        %p182 = scmp.lt.s32.totalorder %s181, 11
        %s183 = scalar_select %p182, %s181, 11
        %s184 = smul.addr %s183, 4
        %s185 = scalar_lea.vmem %s0, %s184
        %s186 = smul.u32 6, %s11
      $region36: #{shell2scale_forward.4} parent=31 // pred_fallthru
        _
    $region32: #{shell2scale_forward.4} parent=5 // pred_fallthru
      _
    %p187 = scmp.le.s32.totalorder 1, %s11
    %p188 = scmp.lt.s32.totalorder %s11, 3
    %p189 = pnand %p187, %p188
    %p190 = pneg %p189
    // Predicated region
    $region37: #{shell2scale_forward.4} parent=5 // pred_check
      _
    $region38: #{shell2scale_forward.4} parent=5 // pred_check_branch
      %192 = sbr.rel (%p189) target = $region40
    $region39: #{shell2scale_forward.4} parent=5 // pred_region
      %s193 = ssub.s32 %s11, 1
      %s194 = smul.u32 6, %s16
      %p195 = scmp.lt.s32.totalorder %s194, 11
      %s196 = scalar_select %p195, %s194, 11
      %s197 = smul.addr %s196, 4
      %s198 = scalar_lea.vmem %s0, %s197
      %p199 = pneg %p37
      %p200 = pneg %p34
      %p201 = pneg %p58
      %p202 = pneg %p55
      %p203 = pneg %p79
      %p204 = pneg %p76
      %p205 = pneg %p100
      %p206 = pneg %p97
      %p207 = pneg %p121
      %p208 = pneg %p118
      %p209 = pneg %p147
      %p210 = pneg %p144
      %s211 = smul.u32 6, %s16
      %p212 = scmp.lt.s32.totalorder %s211, 11
      %s213 = scalar_select %p212, %s211, 11
      %s214 = smul.addr %s213, 8
      %s215 = scalar_lea.vmem %s5, %s214
      %s216 = smul.u32 6, %s16
      %p217 = scmp.lt.s32.totalorder %s216, 11
      %s218 = scalar_select %p217, %s216, 11
      %s219 = smul.addr %s218, 4
      %s220 = scalar_lea.vmem %s0, %s219
      %s221 = smul.u32 6, %s16
      %s222 = smul.u32 6, %s16
      %p223 = scmp.lt.s32.totalorder %s222, 11
      %s224 = scalar_select %p223, %s222, 11
      %s225 = smul.addr %s224, 8
      %s226 = scalar_lea.vmem %s5, %s225
      %s227 = smul.u32 6, %s16
      %v229 = vld [vmem:[%s220] sm:$0xf]
      %v230 = vld [vmem:[%s220 + $0x4] sm:$0xf]
      %v231 = vld [vmem:[%s220 + $0x8] sm:$0xf]
      %v232 = vld [vmem:[%s220 + $0xc] sm:$0xf]
      %v233 = vld [vmem:[%s220 + $0x10] sm:$0xf]
      %v234 = vld [vmem:[%s220 + $0x14] sm:$0xf]
      %v235 = vld [vmem:[%s1] sm:$0x3]
      %v236 = vld [vmem:[%s2] sm:$0x1]
      %v238 = vperm.slane %v236, 0
      %v246 = vunpack.c.l.b16 %v229
      %v247 = vunpack.c.l.b16 %v230
      %v248 = vunpack.c.l.b16 %v231
      %v249 = vunpack.c.l.b16 %v232
      %v250 = vunpack.c.l.b16 %v233
      %v251 = vunpack.c.l.b16 %v234
      %v252 = vpack.c.b16 %v247, %v246
      %v253 = vpack.c.b16 %v249, %v248
      %v254 = vpack.c.b16 %v251, %v250
      %vm255 = vcmask 23552
      %v257 = vsel %vm255, %v252, 0
      %v260 = vsel %vm255, %v253, 0
      %v263 = vsel %vm255, %v254, 0
      %vm265 = vcmask 1040384
      %vm266 = vcmask 1041408
      %v267 = vsel %vm265, 4294967295, 65535
      %v268 = vsel %vm266, %v267, 0
      %v270 = vand.u32 %v235, %v268
      %272 = vmatpush.bf16.msra.mxu0 0
      %273 = vmatpush.bf16.msra.mxu0 0
      %274 = vmatpush.bf16.msra.mxu0 0
      %275 = vmatpush.bf16.msra.mxu0 0
      %276 = vmatpush.bf16.msra.mxu0 0
      %277 = vmatpush.bf16.msra.mxu0 0
      %278 = vmatpush.bf16.msra.mxu0 0
      %279 = vmatpush.bf16.msra.mxu0 %v270
      %280 = vmatmul.bf16.gmra.mxu0 %v257
      %v281 = vpop.f32.mrf.mxu0
      %v282 = vadd.f32 %v238, %v281
      %v283 = vpop.f32.mrf.mxu0
      %v284 = vadd.f32 %v238, %v283
      %285 = vmatmul.bf16.gmra.mxu0 %v260
      %v286 = vpop.f32.mrf.mxu0
      %v287 = vadd.f32 %v238, %v286
      %v288 = vpop.f32.mrf.mxu0
      %v289 = vadd.f32 %v238, %v288
      %290 = vmatmul.bf16.gmra.mxu0 %v263
      %v291 = vpop.f32.mrf.mxu0
      %v292 = vadd.f32 %v238, %v291
      %v293 = vpop.f32.mrf.mxu0
      %v294 = vadd.f32 %v238, %v293
      %295 = vdwg.mxu0
      %v296 = vmax.f32 %v282, 0.0
      %v297 = vmax.f32 %v284, 0.0
      %v298 = vmax.f32 %v287, 0.0
      %v299 = vmax.f32 %v289, 0.0
      %v300 = vmax.f32 %v292, 0.0
      %v301 = vmax.f32 %v294, 0.0
      %v302 = vpack.c.bf16 %v297, %v296
      %v303 = vpack.c.bf16 %v299, %v298
      %v304 = vpack.c.bf16 %v301, %v300
      %v305 = vld [vmem:[%s3] sm:$0xf]
      %v306 = vld [vmem:[%s3 + $0x4] sm:$0xf]
      %v307 = vld [vmem:[%s3 + $0x8] sm:$0xf]
      %v308 = vld [vmem:[%s3 + $0xc] sm:$0xf]
      %v309 = vld [vmem:[%s3 + $0x10] sm:$0xf]
      %v310 = vld [vmem:[%s3 + $0x14] sm:$0xf]
      %v311 = vld [vmem:[%s3 + $0x18] sm:$0xf]
      %v312 = vld [vmem:[%s3 + $0x1c] sm:$0xf]
      %v313 = vld [vmem:[%s3 + $0x20] sm:$0xf]
      %v314 = vld [vmem:[%s3 + $0x24] sm:$0xf]
      %v315 = vld [vmem:[%s3 + $0x28] sm:$0xf]
      %v316 = vld [vmem:[%s3 + $0x2c] sm:$0xf]
      %v317 = vld [vmem:[%s3 + $0x30] sm:$0xf]
      %v318 = vld [vmem:[%s3 + $0x34] sm:$0xf]
      %v319 = vld [vmem:[%s3 + $0x38] sm:$0xf]
      %v320 = vld [vmem:[%s3 + $0x3c] sm:$0xf]
      %v321 = vld [vmem:[%s4] sm:$0x1]
      %v323 = vperm.slane %v321, 0
      %v341 = vunpack.c.l.b16 %v305
      %v342 = vunpack.c.l.b16 %v306
      %v343 = vunpack.c.l.b16 %v307
      %v344 = vunpack.c.l.b16 %v308
      %v345 = vunpack.c.l.b16 %v309
      %v346 = vunpack.c.l.b16 %v310
      %v347 = vunpack.c.l.b16 %v311
      %v348 = vunpack.c.l.b16 %v312
      %v349 = vunpack.c.l.b16 %v313
      %v350 = vunpack.c.l.b16 %v314
      %v351 = vunpack.c.l.b16 %v315
      %v352 = vunpack.c.l.b16 %v316
      %v353 = vunpack.c.l.b16 %v317
      %v354 = vunpack.c.l.b16 %v318
      %v355 = vunpack.c.l.b16 %v319
      %v356 = vunpack.c.l.b16 %v320
      %v357 = vpack.c.b16 %v342, %v341
      %v358 = vpack.c.b16 %v344, %v343
      %v359 = vpack.c.b16 %v346, %v345
      %v360 = vpack.c.b16 %v348, %v347
      %v361 = vpack.c.b16 %v350, %v349
      %v362 = vpack.c.b16 %v352, %v351
      %v363 = vpack.c.b16 %v354, %v353
      %v364 = vpack.c.b16 %v356, %v355
      %373 = vmatpush.bf16.msra.mxu0 %v364
      %374 = vmatpush.bf16.msra.mxu0 %v363
      %375 = vmatpush.bf16.msra.mxu0 %v362
      %376 = vmatpush.bf16.msra.mxu0 %v361
      %377 = vmatpush.bf16.msra.mxu0 %v360
      %378 = vmatpush.bf16.msra.mxu0 %v359
      %379 = vmatpush.bf16.msra.mxu0 %v358
      %380 = vmatpush.bf16.msra.mxu0 %v357
      %381 = vmatmul.bf16.gmra.mxu0 %v302
      %v382 = vpop.f32.mrf.mxu0
      %v383 = vadd.f32 %v323, %v382
      %v384 = vpop.f32.mrf.mxu0
      %v385 = vadd.f32 %v323, %v384
      %386 = vmatmul.bf16.gmra.mxu0 %v303
      %v387 = vpop.f32.mrf.mxu0
      %v388 = vadd.f32 %v323, %v387
      %v389 = vpop.f32.mrf.mxu0
      %v390 = vadd.f32 %v323, %v389
      %391 = vmatmul.bf16.gmra.mxu0 %v304
      %v392 = vpop.f32.mrf.mxu0
      %v393 = vadd.f32 %v323, %v392
      %v394 = vpop.f32.mrf.mxu0
      %v395 = vadd.f32 %v323, %v394
      %396 = vdwg.mxu0
      %397 = vst [vmem:[%s226] sm:$0xff] %v383
      %398 = vst [vmem:[%s226 + $0x8] sm:$0xff] %v385
      %399 = vst [vmem:[%s226 + $0x10] sm:$0xff] %v388
      %400 = vst [vmem:[%s226 + $0x18] sm:$0xff] %v390
      %401 = vst [vmem:[%s226 + $0x20] sm:$0xff] %v393
      %402 = vst [vmem:[%s226 + $0x28] sm:$0xff] %v395
      %s403 = smul.u32 6, %s16
      %p404 = scmp.lt.s32.totalorder %s403, 11
      %s405 = scalar_select %p404, %s403, 11
      %s406 = smul.addr %s405, 8
      %s407 = scalar_lea.vmem %s5, %s406
      // Predicated region
      $region41: #{shell2scale_forward.4} parent=39 // pred_check
        %p408 = pneg %p144
      $region42: #{shell2scale_forward.4} parent=39 // pred_check_branch
        %410 = sbr.rel (%p408) target = $region44
      $region43: #{shell2scale_forward.4} parent=39 // pred_region
        %s411 = smul.u32 6, %s16
      $region44: #{shell2scale_forward.4} parent=39 // pred_fallthru
        _
    $region40: #{shell2scale_forward.4} parent=5 // pred_fallthru
      _
    %p412 = scmp.le.s32.totalorder 2, %s11
    // Predicated region
    $region45: #{shell2scale_forward.4} parent=5 // pred_check
      %p413 = pneg %p412
    $region46: #{shell2scale_forward.4} parent=5 // pred_check_branch
      %415 = sbr.rel (%p413) target = $region48
    $region47: #{shell2scale_forward.4} parent=5 // pred_region
      %s416 = ssub.s32 %s11, 2
      // Predicated region
      $region49: #{shell2scale_forward.4} parent=47 // pred_check
        %p417 = pneg %p150
      $region50: #{shell2scale_forward.4} parent=47 // pred_check_branch
        %419 = sbr.rel (%p417) target = $region52
      $region51: #{shell2scale_forward.4} parent=47 // pred_region
        %s420 = smul.u32 6, %s17
        %p421 = scmp.lt.s32.totalorder %s420, 11
        %s422 = scalar_select %p421, %s420, 11
        %s423 = smul.addr %s422, 8
        %s424 = scalar_lea.vmem %s5, %s423
      $region52: #{shell2scale_forward.4} parent=47 // pred_fallthru
        _
    $region48: #{shell2scale_forward.4} parent=5 // pred_fallthru
      _
  $region6: #{shell2scale_forward.4} parent=0 // loop_footer
    %s15 = sadd.s32 1, %s11
  $region7: #{shell2scale_forward.4} parent=0 // loop_footer_branch
    %10 = sbr.rel target = $region3
  $region8: #{shell2scale_forward.4} parent=0 // loop_exit
    _

// kernel: shell2scale_forward.5
$region0: #{shell2scale_forward.5}
  #allocation0 [shape = 'u32[]', space=smem, size = 0x4, offset = 0x4, fixed_abs, tag = 'smem constant byte address 0x4 - core index']
  #allocation1 [shape = 'u32[72,128]{1,0:T(1,128)}', space=vmem, size = 0x9000, scoped, tag = 'internal scratch']
  %s0 = inlined_call_operand.vmem [shape: f32[96,128], index: 0, kind: input, shape index: {}]
  %s1 = inlined_call_operand.vmem [shape: f32[96,128], index: 1, kind: input, shape index: {}]
  %s2 = inlined_call_operand.vmem [shape: f32[128,128], index: 2, kind: input, shape index: {}]
  %s3 = inlined_call_operand.vmem [shape: f32[1,128], index: 3, kind: input, shape index: {}]
  %s4 = inlined_call_operand.vmem [shape: f32[1,128], index: 4, kind: input, shape index: {}]
  %s5 = inlined_call_operand.vmem [shape: f32[96,128], index: 5, kind: output, shape index: {}]
  %s6 = sld [smem:[#allocation0]]
  $region53: #{shell2scale_forward.5} parent=0
    _
  %s8 = ssub.s32 1, %s6
  %s9 = scalar_select 0, %s8, %s6
  loop: start=0, step=1, limit=4
  $region2: #{shell2scale_forward.5} parent=0 // loop_pre_header
    _
  $region3: #{shell2scale_forward.5} parent=0 // loop_header
    %s11 = sphi 0, %s15
    %p12 = scmp.ge.s32.totalorder %s11, 4
    %s21 = sphi 0, %s23
    %s24 = sphi 0, %s21
    %s25 = sphi 0, %s24
    %s41 = sphi 0, %s25
    %s47 = sphi 0, %s49
    %s50 = sphi 0, %s47
    %s51 = sphi 0, %s50
    %s67 = sphi 0, %s51
    %s71 = sphi 0, %s71
    %s73 = sphi 0, %s71
    %s74 = sphi 0, %s73
    %s88 = sphi 0, %s74
    %s92 = sphi 0, %s92
    %s94 = sphi 0, %s92
    %s95 = sphi 0, %s94
    %s109 = sphi 0, %s95
    %s113 = sphi 0, %s113
    %s115 = sphi 0, %s113
    %s116 = sphi 0, %s115
    %s130 = sphi 0, %s116
    %s136 = sphi 0, %s138
    %s139 = sphi 0, %s136
    %s140 = sphi 0, %s139
    %s156 = sphi 0, %s140
  $region4: #{shell2scale_forward.5} parent=0 // loop_header_branch
    %14 = sbr.rel (%p12) target = $region8
  $region5: #{shell2scale_forward.5} parent=0 // loop_body
    %s16 = ssub.s32 %s11, 1
    %s17 = ssub.s32 %s11, 2
    %s18 = sadd.s32 %s11, 1
    %s19 = ssub.s32 %s11, %s18
    %p20 = scmp.eq.s32.totalorder %s19, 0
    %s22 = sadd.s32 %s21, 1
    %s23 = scalar_select %p20, %s21, %s22
    %p26 = pneg %p20
    %p27 = scmp.eq.s32.totalorder %s11, 1
    %p28 = por %p26, %p27
    %p29 = scmp.ne.s32.totalorder %s21, %s24
    %p30 = scmp.eq.s32.totalorder %s11, 0
    %p31 = por %p29, %p30
    %p32 = scmp.ne.s32.totalorder %s21, %s24
    %p33 = scmp.eq.s32.totalorder %s16, 1
    %p34 = por %p32, %p33
    %p35 = scmp.ne.s32.totalorder %s24, %s25
    %p36 = scmp.eq.s32.totalorder %s16, 0
    %p37 = por %p35, %p36
    %p38 = scmp.ne.s32.totalorder %s24, %s25
    %p39 = scmp.eq.s32.totalorder %s17, 1
    %p40 = por %p38, %p39
    %p42 = scmp.ne.s32.totalorder %s25, %s41
    %p43 = scmp.eq.s32.totalorder %s17, 0
    %p44 = por %p42, %p43
    %s45 = ssub.s32 %s11, %s18
    %p46 = scmp.eq.s32.totalorder %s45, 0
    %s48 = sadd.s32 %s47, 1
    %s49 = scalar_select %p46, %s47, %s48
    %p52 = pneg %p46
    %p53 = scmp.eq.s32.totalorder %s11, 1
    %p54 = por %p52, %p53
    %p55 = scmp.ne.s32.totalorder %s47, %s50
    %p56 = scmp.eq.s32.totalorder %s11, 0
    %p57 = por %p55, %p56
    %p58 = scmp.ne.s32.totalorder %s47, %s50
    %p59 = scmp.eq.s32.totalorder %s16, 1
    %p60 = por %p58, %p59
    %p61 = scmp.ne.s32.totalorder %s50, %s51
    %p62 = scmp.eq.s32.totalorder %s16, 0
    %p63 = por %p61, %p62
    %p64 = scmp.ne.s32.totalorder %s50, %s51
    %p65 = scmp.eq.s32.totalorder %s17, 1
    %p66 = por %p64, %p65
    %p68 = scmp.ne.s32.totalorder %s51, %s67
    %p69 = scmp.eq.s32.totalorder %s17, 0
    %p70 = por %p68, %p69
    %s72 = sadd.s32 %s71, 1
    %p75 = scmp.eq.s32.totalorder %s11, 1
    %p76 = scmp.ne.s32.totalorder %s71, %s73
    %p77 = scmp.eq.s32.totalorder %s11, 0
    %p78 = por %p76, %p77
    %p79 = scmp.ne.s32.totalorder %s71, %s73
    %p80 = scmp.eq.s32.totalorder %s16, 1
    %p81 = por %p79, %p80
    %p82 = scmp.ne.s32.totalorder %s73, %s74
    %p83 = scmp.eq.s32.totalorder %s16, 0
    %p84 = por %p82, %p83
    %p85 = scmp.ne.s32.totalorder %s73, %s74
    %p86 = scmp.eq.s32.totalorder %s17, 1
    %p87 = por %p85, %p86
    %p89 = scmp.ne.s32.totalorder %s74, %s88
    %p90 = scmp.eq.s32.totalorder %s17, 0
    %p91 = por %p89, %p90
    %s93 = sadd.s32 %s92, 1
    %p96 = scmp.eq.s32.totalorder %s11, 1
    %p97 = scmp.ne.s32.totalorder %s92, %s94
    %p98 = scmp.eq.s32.totalorder %s11, 0
    %p99 = por %p97, %p98
    %p100 = scmp.ne.s32.totalorder %s92, %s94
    %p101 = scmp.eq.s32.totalorder %s16, 1
    %p102 = por %p100, %p101
    %p103 = scmp.ne.s32.totalorder %s94, %s95
    %p104 = scmp.eq.s32.totalorder %s16, 0
    %p105 = por %p103, %p104
    %p106 = scmp.ne.s32.totalorder %s94, %s95
    %p107 = scmp.eq.s32.totalorder %s17, 1
    %p108 = por %p106, %p107
    %p110 = scmp.ne.s32.totalorder %s95, %s109
    %p111 = scmp.eq.s32.totalorder %s17, 0
    %p112 = por %p110, %p111
    %s114 = sadd.s32 %s113, 1
    %p117 = scmp.eq.s32.totalorder %s11, 1
    %p118 = scmp.ne.s32.totalorder %s113, %s115
    %p119 = scmp.eq.s32.totalorder %s11, 0
    %p120 = por %p118, %p119
    %p121 = scmp.ne.s32.totalorder %s113, %s115
    %p122 = scmp.eq.s32.totalorder %s16, 1
    %p123 = por %p121, %p122
    %p124 = scmp.ne.s32.totalorder %s115, %s116
    %p125 = scmp.eq.s32.totalorder %s16, 0
    %p126 = por %p124, %p125
    %p127 = scmp.ne.s32.totalorder %s115, %s116
    %p128 = scmp.eq.s32.totalorder %s17, 1
    %p129 = por %p127, %p128
    %p131 = scmp.ne.s32.totalorder %s116, %s130
    %p132 = scmp.eq.s32.totalorder %s17, 0
    %p133 = por %p131, %p132
    %s134 = ssub.s32 %s11, %s18
    %p135 = scmp.eq.s32.totalorder %s134, 0
    %s137 = sadd.s32 %s136, 1
    %s138 = scalar_select %p135, %s136, %s137
    %p141 = pneg %p135
    %p142 = scmp.eq.s32.totalorder %s11, 1
    %p143 = por %p141, %p142
    %p144 = scmp.ne.s32.totalorder %s136, %s139
    %p145 = scmp.eq.s32.totalorder %s11, 0
    %p146 = por %p144, %p145
    %p147 = scmp.ne.s32.totalorder %s136, %s139
    %p148 = scmp.eq.s32.totalorder %s16, 1
    %p149 = por %p147, %p148
    %p150 = scmp.ne.s32.totalorder %s139, %s140
    %p151 = scmp.eq.s32.totalorder %s16, 0
    %p152 = por %p150, %p151
    %p153 = scmp.ne.s32.totalorder %s139, %s140
    %p154 = scmp.eq.s32.totalorder %s17, 1
    %p155 = por %p153, %p154
    %p157 = scmp.ne.s32.totalorder %s140, %s156
    %p158 = scmp.eq.s32.totalorder %s17, 0
    %p159 = por %p157, %p158
    %p160 = scmp.le.s32.totalorder 1, %s11
    %p161 = scmp.lt.s32.totalorder %s11, 3
    %p162 = pnand %p160, %p161
    %p163 = pneg %p162
    // Predicated region
    $region9: #{shell2scale_forward.5} parent=5 // pred_check
      _
    $region10: #{shell2scale_forward.5} parent=5 // pred_check_branch
      %165 = sbr.rel (%p162) target = $region12
    $region11: #{shell2scale_forward.5} parent=5 // pred_region
      %s166 = ssub.s32 %s11, 1
      // Predicated region
      $region13: #{shell2scale_forward.5} parent=11 // pred_check
        %p167 = pneg %p84
      $region14: #{shell2scale_forward.5} parent=11 // pred_check_branch
        %169 = sbr.rel (%p167) target = $region16
      $region15: #{shell2scale_forward.5} parent=11 // pred_region
        _
      $region16: #{shell2scale_forward.5} parent=11 // pred_fallthru
        _
      // Predicated region
      $region17: #{shell2scale_forward.5} parent=11 // pred_check
        %p170 = pneg %p105
      $region18: #{shell2scale_forward.5} parent=11 // pred_check_branch
        %172 = sbr.rel (%p170) target = $region20
      $region19: #{shell2scale_forward.5} parent=11 // pred_region
        _
      $region20: #{shell2scale_forward.5} parent=11 // pred_fallthru
        _
      // Predicated region
      $region21: #{shell2scale_forward.5} parent=11 // pred_check
        %p173 = pneg %p126
      $region22: #{shell2scale_forward.5} parent=11 // pred_check_branch
        %175 = sbr.rel (%p173) target = $region24
      $region23: #{shell2scale_forward.5} parent=11 // pred_region
        _
      $region24: #{shell2scale_forward.5} parent=11 // pred_fallthru
        _
    $region12: #{shell2scale_forward.5} parent=5 // pred_fallthru
      _
    %p176 = scmp.lt.s32.totalorder %s11, 2
    // Predicated region
    $region25: #{shell2scale_forward.5} parent=5 // pred_check
      %p177 = pneg %p176
    $region26: #{shell2scale_forward.5} parent=5 // pred_check_branch
      %179 = sbr.rel (%p177) target = $region28
    $region27: #{shell2scale_forward.5} parent=5 // pred_region
      // Predicated region
      $region29: #{shell2scale_forward.5} parent=27 // pred_check
        %p180 = pneg %p31
      $region30: #{shell2scale_forward.5} parent=27 // pred_check_branch
        %182 = sbr.rel (%p180) target = $region32
      $region31: #{shell2scale_forward.5} parent=27 // pred_region
        %s183 = smul.u32 6, %s11
        %p184 = scmp.lt.s32.totalorder %s183, 11
        %s185 = scalar_select %p184, %s183, 11
        %s186 = smul.addr %s185, 8
        %s187 = scalar_lea.vmem %s0, %s186
        %s188 = smul.u32 6, %s11
      $region32: #{shell2scale_forward.5} parent=27 // pred_fallthru
        _
      // Predicated region
      $region33: #{shell2scale_forward.5} parent=27 // pred_check
        %p189 = pneg %p57
      $region34: #{shell2scale_forward.5} parent=27 // pred_check_branch
        %191 = sbr.rel (%p189) target = $region36
      $region35: #{shell2scale_forward.5} parent=27 // pred_region
        %s192 = smul.u32 6, %s11
        %p193 = scmp.lt.s32.totalorder %s192, 11
        %s194 = scalar_select %p193, %s192, 11
        %s195 = smul.addr %s194, 8
        %s196 = scalar_lea.vmem %s1, %s195
        %s197 = smul.u32 6, %s11
      $region36: #{shell2scale_forward.5} parent=27 // pred_fallthru
        _
    $region28: #{shell2scale_forward.5} parent=5 // pred_fallthru
      _
    %p198 = scmp.le.s32.totalorder 1, %s11
    %p199 = scmp.lt.s32.totalorder %s11, 3
    %p200 = pnand %p198, %p199
    %p201 = pneg %p200
    // Predicated region
    $region37: #{shell2scale_forward.5} parent=5 // pred_check
      _
    $region38: #{shell2scale_forward.5} parent=5 // pred_check_branch
      %203 = sbr.rel (%p200) target = $region40
    $region39: #{shell2scale_forward.5} parent=5 // pred_region
      %s204 = ssub.s32 %s11, 1
      %s205 = smul.u32 6, %s16
      %p206 = scmp.lt.s32.totalorder %s205, 11
      %s207 = scalar_select %p206, %s205, 11
      %s208 = smul.addr %s207, 8
      %s209 = scalar_lea.vmem %s0, %s208
      %p210 = pneg %p37
      %p211 = pneg %p34
      %s212 = smul.u32 6, %s16
      %p213 = scmp.lt.s32.totalorder %s212, 11
      %s214 = scalar_select %p213, %s212, 11
      %s215 = smul.addr %s214, 8
      %s216 = scalar_lea.vmem %s1, %s215
      %p217 = pneg %p63
      %p218 = pneg %p60
      %p219 = pneg %p84
      %p220 = pneg %p81
      %p221 = pneg %p105
      %p222 = pneg %p102
      %p223 = pneg %p126
      %p224 = pneg %p123
      %p225 = pneg %p152
      %p226 = pneg %p149
      %s227 = smul.u32 6, %s16
      %p228 = scmp.lt.s32.totalorder %s227, 11
      %s229 = scalar_select %p228, %s227, 11
      %s230 = smul.addr %s229, 8
      %s231 = scalar_lea.vmem %s5, %s230
      %s232 = smul.u32 6, %s16
      %p233 = scmp.lt.s32.totalorder %s232, 11
      %s234 = scalar_select %p233, %s232, 11
      %s235 = smul.addr %s234, 8
      %s236 = scalar_lea.vmem %s0, %s235
      %s237 = smul.u32 6, %s16
      %s238 = smul.u32 6, %s16
      %p239 = scmp.lt.s32.totalorder %s238, 11
      %s240 = scalar_select %p239, %s238, 11
      %s241 = smul.addr %s240, 8
      %s242 = scalar_lea.vmem %s1, %s241
      %s243 = smul.u32 6, %s16
      %s244 = smul.u32 6, %s16
      %p245 = scmp.lt.s32.totalorder %s244, 11
      %s246 = scalar_select %p245, %s244, 11
      %s247 = smul.addr %s246, 8
      %s248 = scalar_lea.vmem %s5, %s247
      %s249 = smul.u32 6, %s16
      %v250 = vld [vmem:[%s236] sm:$0xff]
      %v251 = vld [vmem:[%s236 + $0x8] sm:$0xff]
      %v252 = vld [vmem:[%s236 + $0x10] sm:$0xff]
      %v253 = vld [vmem:[%s236 + $0x18] sm:$0xff]
      %v254 = vld [vmem:[%s236 + $0x20] sm:$0xff]
      %v255 = vld [vmem:[%s236 + $0x28] sm:$0xff]
      %v256 = vld [vmem:[%s242] sm:$0xff]
      %v257 = vld [vmem:[%s242 + $0x8] sm:$0xff]
      %v258 = vld [vmem:[%s242 + $0x10] sm:$0xff]
      %v259 = vld [vmem:[%s242 + $0x18] sm:$0xff]
      %v260 = vld [vmem:[%s242 + $0x20] sm:$0xff]
      %v261 = vld [vmem:[%s242 + $0x28] sm:$0xff]
      %vm262 = vcmp.gt.f32.partialorder %v250, %v256
      %vm263 = vcmp.gt.f32.partialorder %v251, %v257
      %vm264 = vcmp.gt.f32.partialorder %v252, %v258
      %vm265 = vcmp.gt.f32.partialorder %v253, %v259
      %vm266 = vcmp.gt.f32.partialorder %v254, %v260
      %vm267 = vcmp.gt.f32.partialorder %v255, %v261
      %v268 = vsel %vm262, 1, 0
      %v269 = vsel %vm263, 1, 0
      %v270 = vsel %vm264, 1, 0
      %v271 = vsel %vm265, 1, 0
      %v272 = vsel %vm266, 1, 0
      %v273 = vsel %vm267, 1, 0
      %v274 = vcvt.s32.f32 %v268
      %v275 = vcvt.s32.f32 %v269
      %v276 = vcvt.s32.f32 %v270
      %v277 = vcvt.s32.f32 %v271
      %v278 = vcvt.s32.f32 %v272
      %v279 = vcvt.s32.f32 %v273
      %v280 = vld [vmem:[%s2] sm:$0xff]
      %v281 = vld [vmem:[%s2 + $0x8] sm:$0xff]
      %v282 = vld [vmem:[%s2 + $0x10] sm:$0xff]
      %v283 = vld [vmem:[%s2 + $0x18] sm:$0xff]
      %v284 = vld [vmem:[%s2 + $0x20] sm:$0xff]
      %v285 = vld [vmem:[%s2 + $0x28] sm:$0xff]
      %v286 = vld [vmem:[%s2 + $0x30] sm:$0xff]
      %v287 = vld [vmem:[%s2 + $0x38] sm:$0xff]
      %v288 = vld [vmem:[%s2 + $0x40] sm:$0xff]
      %v289 = vld [vmem:[%s2 + $0x48] sm:$0xff]
      %v290 = vld [vmem:[%s2 + $0x50] sm:$0xff]
      %v291 = vld [vmem:[%s2 + $0x58] sm:$0xff]
      %v292 = vld [vmem:[%s2 + $0x60] sm:$0xff]
      %v293 = vld [vmem:[%s2 + $0x68] sm:$0xff]
      %v294 = vld [vmem:[%s2 + $0x70] sm:$0xff]
      %v295 = vld [vmem:[%s2 + $0x78] sm:$0xff]
      %296 = vmatpush.msra.mxu0 %v295
      %297 = vmatpush.msra.mxu0 %v294
      %298 = vmatpush.msra.mxu0 %v293
      %299 = vmatpush.msra.mxu0 %v292
      %300 = vmatpush.msra.mxu0 %v291
      %301 = vmatpush.msra.mxu0 %v290
      %302 = vmatpush.msra.mxu0 %v289
      %303 = vmatpush.msra.mxu0 %v288
      %304 = vmatpush.msra.mxu0 %v287
      %305 = vmatpush.msra.mxu0 %v286
      %306 = vmatpush.msra.mxu0 %v285
      %307 = vmatpush.msra.mxu0 %v284
      %308 = vmatpush.msra.mxu0 %v283
      %309 = vmatpush.msra.mxu0 %v282
      %310 = vmatpush.msra.mxu0 %v281
      %311 = vmatpush.msra.mxu0 %v280
      %312 = vmatmul.f32.gmra.mxu0 %v274
      %v313 = vpop.f32.mrf.mxu0
      %v314 = vadd.f32 0.0, %v313
      %315 = vmatmul.f32.gmra.mxu0 %v275
      %v316 = vpop.f32.mrf.mxu0
      %v317 = vadd.f32 0.0, %v316
      %318 = vmatmul.f32.gmra.mxu0 %v276
      %v319 = vpop.f32.mrf.mxu0
      %v320 = vadd.f32 0.0, %v319
      %321 = vmatmul.f32.gmra.mxu0 %v277
      %v322 = vpop.f32.mrf.mxu0
      %v323 = vadd.f32 0.0, %v322
      %324 = vmatmul.f32.gmra.mxu0 %v278
      %v325 = vpop.f32.mrf.mxu0
      %v326 = vadd.f32 0.0, %v325
      %327 = vmatmul.f32.gmra.mxu0 %v279
      %v328 = vpop.f32.mrf.mxu0
      %v329 = vadd.f32 0.0, %v328
      %330 = vdwg.mxu0
      %vm331 = vcmp.gt.f32.partialorder %v314, 0.5
      %vm332 = vcmp.gt.f32.partialorder %v317, 0.5
      %vm333 = vcmp.gt.f32.partialorder %v320, 0.5
      %vm334 = vcmp.gt.f32.partialorder %v323, 0.5
      %vm335 = vcmp.gt.f32.partialorder %v326, 0.5
      %vm336 = vcmp.gt.f32.partialorder %v329, 0.5
      %v337 = vld [vmem:[%s3] sm:$0x1]
      %v339 = vperm.slane %v337, 0
      %v341 = vmul.f32 %v250, %v339
      %v342 = vmul.f32 %v251, %v339
      %v343 = vmul.f32 %v252, %v339
      %v344 = vmul.f32 %v253, %v339
      %v345 = vmul.f32 %v254, %v339
      %v346 = vmul.f32 %v255, %v339
      %v347 = vld [vmem:[%s4] sm:$0x1]
      %v349 = vperm.slane %v347, 0
      %v351 = vadd.f32 %v341, %v349
      %v352 = vadd.f32 %v342, %v349
      %v353 = vadd.f32 %v343, %v349
      %v354 = vadd.f32 %v344, %v349
      %v355 = vadd.f32 %v345, %v349
      %v356 = vadd.f32 %v346, %v349
      %v357 = vsel %vm331, %v351, %v256
      %v358 = vsel %vm332, %v352, %v257
      %v359 = vsel %vm333, %v353, %v258
      %v360 = vsel %vm334, %v354, %v259
      %v361 = vsel %vm335, %v355, %v260
      %v362 = vsel %vm336, %v356, %v261
      %363 = vst [vmem:[%s248] sm:$0xff] %v357
      %364 = vst [vmem:[%s248 + $0x8] sm:$0xff] %v358
      %365 = vst [vmem:[%s248 + $0x10] sm:$0xff] %v359
      %366 = vst [vmem:[%s248 + $0x18] sm:$0xff] %v360
      %367 = vst [vmem:[%s248 + $0x20] sm:$0xff] %v361
      %368 = vst [vmem:[%s248 + $0x28] sm:$0xff] %v362
      %s369 = smul.u32 6, %s16
      %p370 = scmp.lt.s32.totalorder %s369, 11
      %s371 = scalar_select %p370, %s369, 11
      %s372 = smul.addr %s371, 8
      %s373 = scalar_lea.vmem %s5, %s372
      // Predicated region
      $region41: #{shell2scale_forward.5} parent=39 // pred_check
        %p374 = pneg %p149
      $region42: #{shell2scale_forward.5} parent=39 // pred_check_branch
        %376 = sbr.rel (%p374) target = $region44
      $region43: #{shell2scale_forward.5} parent=39 // pred_region
        %s377 = smul.u32 6, %s16
      $region44: #{shell2scale_forward.5} parent=39 // pred_fallthru
        _
    $region40: #{shell2scale_forward.5} parent=5 // pred_fallthru
      _
    %p378 = scmp.le.s32.totalorder 2, %s11
    // Predicated region
    $region45: #{shell2scale_forward.5} parent=5 // pred_check
      %p379 = pneg %p378
    $region46: #{shell2scale_forward.5} parent=5 // pred_check_branch
      %381 = sbr.rel (%p379) target = $region48
    $region47: #{shell2scale_forward.5} parent=5 // pred_region
      %s382 = ssub.s32 %s11, 2
      // Predicated region
      $region49: #{shell2scale_forward.5} parent=47 // pred_check
        %p383 = pneg %p155
      $region50: #{shell2scale_forward.5} parent=47 // pred_check_branch
        %385 = sbr.rel (%p383) target = $region52
      $region51: #{shell2scale_forward.5} parent=47 // pred_region
        %s386 = smul.u32 6, %s17
        %p387 = scmp.lt.s32.totalorder %s386, 11
        %s388 = scalar_select %p387, %s386, 11
        %s389 = smul.addr %s388, 8
        %s390 = scalar_lea.vmem %s5, %s389
      $region52: #{shell2scale_forward.5} parent=47 // pred_fallthru
        _
    $region48: #{shell2scale_forward.5} parent=5 // pred_fallthru
      _
  $region6: #{shell2scale_forward.5} parent=0 // loop_footer
    %s15 = sadd.s32 1, %s11
  $region7: #{shell2scale_forward.5} parent=0 // loop_footer_branch
    %10 = sbr.rel target = $region3
  $region8: #{shell2scale_forward.5} parent=0 // loop_exit
    _

// kernel: shell2scale_forward.3
$region0: #{shell2scale_forward.3}
  #allocation0 [shape = 'u32[]', space=smem, size = 0x4, offset = 0x4, fixed_abs, tag = 'smem constant byte address 0x4 - core index']
  #allocation1 [shape = 'u32[72,128]{1,0:T(1,128)}', space=vmem, size = 0x9000, scoped, tag = 'internal scratch']
  %s0 = inlined_call_operand.vmem [shape: bf16[672,3], index: 0, kind: input, shape index: {}]
  %s1 = inlined_call_operand.vmem [shape: bf16[3,128], index: 1, kind: input, shape index: {}]
  %s2 = inlined_call_operand.vmem [shape: f32[1,128], index: 2, kind: input, shape index: {}]
  %s3 = inlined_call_operand.vmem [shape: bf16[128,128], index: 3, kind: input, shape index: {}]
  %s4 = inlined_call_operand.vmem [shape: f32[1,128], index: 4, kind: input, shape index: {}]
  %s5 = inlined_call_operand.vmem [shape: f32[672,128], index: 5, kind: output, shape index: {}]
  %s6 = sld [smem:[#allocation0]]
  $region53: #{shell2scale_forward.3} parent=0
    _
  %s8 = ssub.s32 1, %s6
  %s9 = scalar_select 0, %s8, %s6
  loop: start=0, step=1, limit=4
  $region2: #{shell2scale_forward.3} parent=0 // loop_pre_header
    _
  $region3: #{shell2scale_forward.3} parent=0 // loop_header
    %s11 = sphi 0, %s15
    %p12 = scmp.ge.s32.totalorder %s11, 4
    %s21 = sphi 0, %s23
    %s24 = sphi 0, %s21
    %s25 = sphi 0, %s24
    %s41 = sphi 0, %s25
    %s45 = sphi 0, %s45
    %s47 = sphi 0, %s45
    %s48 = sphi 0, %s47
    %s62 = sphi 0, %s48
    %s66 = sphi 0, %s66
    %s68 = sphi 0, %s66
    %s69 = sphi 0, %s68
    %s83 = sphi 0, %s69
    %s87 = sphi 0, %s87
    %s89 = sphi 0, %s87
    %s90 = sphi 0, %s89
    %s104 = sphi 0, %s90
    %s108 = sphi 0, %s108
    %s110 = sphi 0, %s108
    %s111 = sphi 0, %s110
    %s125 = sphi 0, %s111
    %s131 = sphi 0, %s133
    %s134 = sphi 0, %s131
    %s135 = sphi 0, %s134
    %s151 = sphi 0, %s135
  $region4: #{shell2scale_forward.3} parent=0 // loop_header_branch
    %14 = sbr.rel (%p12) target = $region8
  $region5: #{shell2scale_forward.3} parent=0 // loop_body
    %s16 = ssub.s32 %s11, 1
    %s17 = ssub.s32 %s11, 2
    %s18 = sadd.s32 %s11, 1
    %s19 = ssub.s32 %s11, %s18
    %p20 = scmp.eq.s32.totalorder %s19, 0
    %s22 = sadd.s32 %s21, 1
    %s23 = scalar_select %p20, %s21, %s22
    %p26 = pneg %p20
    %p27 = scmp.eq.s32.totalorder %s11, 1
    %p28 = por %p26, %p27
    %p29 = scmp.ne.s32.totalorder %s21, %s24
    %p30 = scmp.eq.s32.totalorder %s11, 0
    %p31 = por %p29, %p30
    %p32 = scmp.ne.s32.totalorder %s21, %s24
    %p33 = scmp.eq.s32.totalorder %s16, 1
    %p34 = por %p32, %p33
    %p35 = scmp.ne.s32.totalorder %s24, %s25
    %p36 = scmp.eq.s32.totalorder %s16, 0
    %p37 = por %p35, %p36
    %p38 = scmp.ne.s32.totalorder %s24, %s25
    %p39 = scmp.eq.s32.totalorder %s17, 1
    %p40 = por %p38, %p39
    %p42 = scmp.ne.s32.totalorder %s25, %s41
    %p43 = scmp.eq.s32.totalorder %s17, 0
    %p44 = por %p42, %p43
    %s46 = sadd.s32 %s45, 1
    %p49 = scmp.eq.s32.totalorder %s11, 1
    %p50 = scmp.ne.s32.totalorder %s45, %s47
    %p51 = scmp.eq.s32.totalorder %s11, 0
    %p52 = por %p50, %p51
    %p53 = scmp.ne.s32.totalorder %s45, %s47
    %p54 = scmp.eq.s32.totalorder %s16, 1
    %p55 = por %p53, %p54
    %p56 = scmp.ne.s32.totalorder %s47, %s48
    %p57 = scmp.eq.s32.totalorder %s16, 0
    %p58 = por %p56, %p57
    %p59 = scmp.ne.s32.totalorder %s47, %s48
    %p60 = scmp.eq.s32.totalorder %s17, 1
    %p61 = por %p59, %p60
    %p63 = scmp.ne.s32.totalorder %s48, %s62
    %p64 = scmp.eq.s32.totalorder %s17, 0
    %p65 = por %p63, %p64
    %s67 = sadd.s32 %s66, 1
    %p70 = scmp.eq.s32.totalorder %s11, 1
    %p71 = scmp.ne.s32.totalorder %s66, %s68
    %p72 = scmp.eq.s32.totalorder %s11, 0
    %p73 = por %p71, %p72
    %p74 = scmp.ne.s32.totalorder %s66, %s68
    %p75 = scmp.eq.s32.totalorder %s16, 1
    %p76 = por %p74, %p75
    %p77 = scmp.ne.s32.totalorder %s68, %s69
    %p78 = scmp.eq.s32.totalorder %s16, 0
    %p79 = por %p77, %p78
    %p80 = scmp.ne.s32.totalorder %s68, %s69
    %p81 = scmp.eq.s32.totalorder %s17, 1
    %p82 = por %p80, %p81
    %p84 = scmp.ne.s32.totalorder %s69, %s83
    %p85 = scmp.eq.s32.totalorder %s17, 0
    %p86 = por %p84, %p85
    %s88 = sadd.s32 %s87, 1
    %p91 = scmp.eq.s32.totalorder %s11, 1
    %p92 = scmp.ne.s32.totalorder %s87, %s89
    %p93 = scmp.eq.s32.totalorder %s11, 0
    %p94 = por %p92, %p93
    %p95 = scmp.ne.s32.totalorder %s87, %s89
    %p96 = scmp.eq.s32.totalorder %s16, 1
    %p97 = por %p95, %p96
    %p98 = scmp.ne.s32.totalorder %s89, %s90
    %p99 = scmp.eq.s32.totalorder %s16, 0
    %p100 = por %p98, %p99
    %p101 = scmp.ne.s32.totalorder %s89, %s90
    %p102 = scmp.eq.s32.totalorder %s17, 1
    %p103 = por %p101, %p102
    %p105 = scmp.ne.s32.totalorder %s90, %s104
    %p106 = scmp.eq.s32.totalorder %s17, 0
    %p107 = por %p105, %p106
    %s109 = sadd.s32 %s108, 1
    %p112 = scmp.eq.s32.totalorder %s11, 1
    %p113 = scmp.ne.s32.totalorder %s108, %s110
    %p114 = scmp.eq.s32.totalorder %s11, 0
    %p115 = por %p113, %p114
    %p116 = scmp.ne.s32.totalorder %s108, %s110
    %p117 = scmp.eq.s32.totalorder %s16, 1
    %p118 = por %p116, %p117
    %p119 = scmp.ne.s32.totalorder %s110, %s111
    %p120 = scmp.eq.s32.totalorder %s16, 0
    %p121 = por %p119, %p120
    %p122 = scmp.ne.s32.totalorder %s110, %s111
    %p123 = scmp.eq.s32.totalorder %s17, 1
    %p124 = por %p122, %p123
    %p126 = scmp.ne.s32.totalorder %s111, %s125
    %p127 = scmp.eq.s32.totalorder %s17, 0
    %p128 = por %p126, %p127
    %s129 = ssub.s32 %s11, %s18
    %p130 = scmp.eq.s32.totalorder %s129, 0
    %s132 = sadd.s32 %s131, 1
    %s133 = scalar_select %p130, %s131, %s132
    %p136 = pneg %p130
    %p137 = scmp.eq.s32.totalorder %s11, 1
    %p138 = por %p136, %p137
    %p139 = scmp.ne.s32.totalorder %s131, %s134
    %p140 = scmp.eq.s32.totalorder %s11, 0
    %p141 = por %p139, %p140
    %p142 = scmp.ne.s32.totalorder %s131, %s134
    %p143 = scmp.eq.s32.totalorder %s16, 1
    %p144 = por %p142, %p143
    %p145 = scmp.ne.s32.totalorder %s134, %s135
    %p146 = scmp.eq.s32.totalorder %s16, 0
    %p147 = por %p145, %p146
    %p148 = scmp.ne.s32.totalorder %s134, %s135
    %p149 = scmp.eq.s32.totalorder %s17, 1
    %p150 = por %p148, %p149
    %p152 = scmp.ne.s32.totalorder %s135, %s151
    %p153 = scmp.eq.s32.totalorder %s17, 0
    %p154 = por %p152, %p153
    %p155 = scmp.le.s32.totalorder 1, %s11
    %p156 = scmp.lt.s32.totalorder %s11, 3
    %p157 = pnand %p155, %p156
    %p158 = pneg %p157
    // Predicated region
    $region9: #{shell2scale_forward.3} parent=5 // pred_check
      _
    $region10: #{shell2scale_forward.3} parent=5 // pred_check_branch
      %160 = sbr.rel (%p157) target = $region12
    $region11: #{shell2scale_forward.3} parent=5 // pred_region
      %s161 = ssub.s32 %s11, 1
      // Predicated region
      $region13: #{shell2scale_forward.3} parent=11 // pred_check
        %p162 = pneg %p58
      $region14: #{shell2scale_forward.3} parent=11 // pred_check_branch
        %164 = sbr.rel (%p162) target = $region16
      $region15: #{shell2scale_forward.3} parent=11 // pred_region
        _
      $region16: #{shell2scale_forward.3} parent=11 // pred_fallthru
        _
      // Predicated region
      $region17: #{shell2scale_forward.3} parent=11 // pred_check
        %p165 = pneg %p79
      $region18: #{shell2scale_forward.3} parent=11 // pred_check_branch
        %167 = sbr.rel (%p165) target = $region20
      $region19: #{shell2scale_forward.3} parent=11 // pred_region
        _
      $region20: #{shell2scale_forward.3} parent=11 // pred_fallthru
        _
      // Predicated region
      $region21: #{shell2scale_forward.3} parent=11 // pred_check
        %p168 = pneg %p100
      $region22: #{shell2scale_forward.3} parent=11 // pred_check_branch
        %170 = sbr.rel (%p168) target = $region24
      $region23: #{shell2scale_forward.3} parent=11 // pred_region
        _
      $region24: #{shell2scale_forward.3} parent=11 // pred_fallthru
        _
      // Predicated region
      $region25: #{shell2scale_forward.3} parent=11 // pred_check
        %p171 = pneg %p121
      $region26: #{shell2scale_forward.3} parent=11 // pred_check_branch
        %173 = sbr.rel (%p171) target = $region28
      $region27: #{shell2scale_forward.3} parent=11 // pred_region
        _
      $region28: #{shell2scale_forward.3} parent=11 // pred_fallthru
        _
    $region12: #{shell2scale_forward.3} parent=5 // pred_fallthru
      _
    %p174 = scmp.lt.s32.totalorder %s11, 2
    // Predicated region
    $region29: #{shell2scale_forward.3} parent=5 // pred_check
      %p175 = pneg %p174
    $region30: #{shell2scale_forward.3} parent=5 // pred_check_branch
      %177 = sbr.rel (%p175) target = $region32
    $region31: #{shell2scale_forward.3} parent=5 // pred_region
      // Predicated region
      $region33: #{shell2scale_forward.3} parent=31 // pred_check
        %p178 = pneg %p31
      $region34: #{shell2scale_forward.3} parent=31 // pred_check_branch
        %180 = sbr.rel (%p178) target = $region36
      $region35: #{shell2scale_forward.3} parent=31 // pred_region
        %s181 = smul.u32 42, %s11
        %p182 = scmp.lt.s32.totalorder %s181, 83
        %s183 = scalar_select %p182, %s181, 83
        %s184 = smul.addr %s183, 4
        %s185 = scalar_lea.vmem %s0, %s184
        %s186 = smul.u32 42, %s11
      $region36: #{shell2scale_forward.3} parent=31 // pred_fallthru
        _
    $region32: #{shell2scale_forward.3} parent=5 // pred_fallthru
      _
    %p187 = scmp.le.s32.totalorder 1, %s11
    %p188 = scmp.lt.s32.totalorder %s11, 3
    %p189 = pnand %p187, %p188
    %p190 = pneg %p189
    // Predicated region
    $region37: #{shell2scale_forward.3} parent=5 // pred_check
      _
    $region38: #{shell2scale_forward.3} parent=5 // pred_check_branch
      %192 = sbr.rel (%p189) target = $region40
    $region39: #{shell2scale_forward.3} parent=5 // pred_region
      %s193 = ssub.s32 %s11, 1
      %s194 = smul.u32 42, %s16
      %p195 = scmp.lt.s32.totalorder %s194, 83
      %s196 = scalar_select %p195, %s194, 83
      %s197 = smul.addr %s196, 4
      %s198 = scalar_lea.vmem %s0, %s197
      %p199 = pneg %p37
      %p200 = pneg %p34
      %p201 = pneg %p58
      %p202 = pneg %p55
      %p203 = pneg %p79
      %p204 = pneg %p76
      %p205 = pneg %p100
      %p206 = pneg %p97
      %p207 = pneg %p121
      %p208 = pneg %p118
      %p209 = pneg %p147
      %p210 = pneg %p144
      %s211 = smul.u32 42, %s16
      %p212 = scmp.lt.s32.totalorder %s211, 83
      %s213 = scalar_select %p212, %s211, 83
      %s214 = smul.addr %s213, 8
      %s215 = scalar_lea.vmem %s5, %s214
      %s216 = smul.u32 42, %s16
      %p217 = scmp.lt.s32.totalorder %s216, 83
      %s218 = scalar_select %p217, %s216, 83
      %s219 = smul.addr %s218, 4
      %s220 = scalar_lea.vmem %s0, %s219
      %s221 = smul.u32 42, %s16
      %s222 = smul.u32 42, %s16
      %p223 = scmp.lt.s32.totalorder %s222, 83
      %s224 = scalar_select %p223, %s222, 83
      %s225 = smul.addr %s224, 8
      %s226 = scalar_lea.vmem %s5, %s225
      %s227 = smul.u32 42, %s16
      %v229 = vld [vmem:[%s220] sm:$0xf]
      %v230 = vld [vmem:[%s220 + $0x4] sm:$0xf]
      %v231 = vld [vmem:[%s220 + $0x8] sm:$0xf]
      %v232 = vld [vmem:[%s220 + $0xc] sm:$0xf]
      %v233 = vld [vmem:[%s220 + $0x10] sm:$0xf]
      %v234 = vld [vmem:[%s220 + $0x14] sm:$0xf]
      %v235 = vld [vmem:[%s220 + $0x18] sm:$0xf]
      %v236 = vld [vmem:[%s220 + $0x1c] sm:$0xf]
      %v237 = vld [vmem:[%s220 + $0x20] sm:$0xf]
      %v238 = vld [vmem:[%s220 + $0x24] sm:$0xf]
      %v239 = vld [vmem:[%s220 + $0x28] sm:$0xf]
      %v240 = vld [vmem:[%s220 + $0x2c] sm:$0xf]
      %v241 = vld [vmem:[%s220 + $0x30] sm:$0xf]
      %v242 = vld [vmem:[%s220 + $0x34] sm:$0xf]
      %v243 = vld [vmem:[%s220 + $0x38] sm:$0xf]
      %v244 = vld [vmem:[%s220 + $0x3c] sm:$0xf]
      %v245 = vld [vmem:[%s220 + $0x40] sm:$0xf]
      %v246 = vld [vmem:[%s220 + $0x44] sm:$0xf]
      %v247 = vld [vmem:[%s220 + $0x48] sm:$0xf]
      %v248 = vld [vmem:[%s220 + $0x4c] sm:$0xf]
      %v249 = vld [vmem:[%s220 + $0x50] sm:$0xf]
      %v250 = vld [vmem:[%s220 + $0x54] sm:$0xf]
      %v251 = vld [vmem:[%s220 + $0x58] sm:$0xf]
      %v252 = vld [vmem:[%s220 + $0x5c] sm:$0xf]
      %v253 = vld [vmem:[%s220 + $0x60] sm:$0xf]
      %v254 = vld [vmem:[%s220 + $0x64] sm:$0xf]
      %v255 = vld [vmem:[%s220 + $0x68] sm:$0xf]
      %v256 = vld [vmem:[%s220 + $0x6c] sm:$0xf]
      %v257 = vld [vmem:[%s220 + $0x70] sm:$0xf]
      %v258 = vld [vmem:[%s220 + $0x74] sm:$0xf]
      %v259 = vld [vmem:[%s220 + $0x78] sm:$0xf]
      %v260 = vld [vmem:[%s220 + $0x7c] sm:$0xf]
      %v261 = vld [vmem:[%s220 + $0x80] sm:$0xf]
      %v262 = vld [vmem:[%s220 + $0x84] sm:$0xf]
      %v263 = vld [vmem:[%s220 + $0x88] sm:$0xf]
      %v264 = vld [vmem:[%s220 + $0x8c] sm:$0xf]
      %v265 = vld [vmem:[%s220 + $0x90] sm:$0xf]
      %v266 = vld [vmem:[%s220 + $0x94] sm:$0xf]
      %v267 = vld [vmem:[%s220 + $0x98] sm:$0xf]
      %v268 = vld [vmem:[%s220 + $0x9c] sm:$0xf]
      %v269 = vld [vmem:[%s220 + $0xa0] sm:$0xf]
      %v270 = vld [vmem:[%s220 + $0xa4] sm:$0xf]
      %v271 = vld [vmem:[%s1] sm:$0x3]
      %v272 = vld [vmem:[%s2] sm:$0x1]
      %v274 = vperm.slane %v272, 0
      %v318 = vunpack.c.l.b16 %v229
      %v319 = vunpack.c.l.b16 %v230
      %v320 = vunpack.c.l.b16 %v231
      %v321 = vunpack.c.l.b16 %v232
      %v322 = vunpack.c.l.b16 %v233
      %v323 = vunpack.c.l.b16 %v234
      %v324 = vunpack.c.l.b16 %v235
      %v325 = vunpack.c.l.b16 %v236
      %v326 = vunpack.c.l.b16 %v237
      %v327 = vunpack.c.l.b16 %v238
      %v328 = vunpack.c.l.b16 %v239
      %v329 = vunpack.c.l.b16 %v240
      %v330 = vunpack.c.l.b16 %v241
      %v331 = vunpack.c.l.b16 %v242
      %v332 = vunpack.c.l.b16 %v243
      %v333 = vunpack.c.l.b16 %v244
      %v334 = vunpack.c.l.b16 %v245
      %v335 = vunpack.c.l.b16 %v246
      %v336 = vunpack.c.l.b16 %v247
      %v337 = vunpack.c.l.b16 %v248
      %v338 = vunpack.c.l.b16 %v249
      %v339 = vunpack.c.l.b16 %v250
      %v340 = vunpack.c.l.b16 %v251
      %v341 = vunpack.c.l.b16 %v252
      %v342 = vunpack.c.l.b16 %v253
      %v343 = vunpack.c.l.b16 %v254
      %v344 = vunpack.c.l.b16 %v255
      %v345 = vunpack.c.l.b16 %v256
      %v346 = vunpack.c.l.b16 %v257
      %v347 = vunpack.c.l.b16 %v258
      %v348 = vunpack.c.l.b16 %v259
      %v349 = vunpack.c.l.b16 %v260
      %v350 = vunpack.c.l.b16 %v261
      %v351 = vunpack.c.l.b16 %v262
      %v352 = vunpack.c.l.b16 %v263
      %v353 = vunpack.c.l.b16 %v264
      %v354 = vunpack.c.l.b16 %v265
      %v355 = vunpack.c.l.b16 %v266
      %v356 = vunpack.c.l.b16 %v267
      %v357 = vunpack.c.l.b16 %v268
      %v358 = vunpack.c.l.b16 %v269
      %v359 = vunpack.c.l.b16 %v270
      %v360 = vpack.c.b16 %v319, %v318
      %v361 = vpack.c.b16 %v321, %v320
      %v362 = vpack.c.b16 %v323, %v322
      %v363 = vpack.c.b16 %v325, %v324
      %v364 = vpack.c.b16 %v327, %v326
      %v365 = vpack.c.b16 %v329, %v328
      %v366 = vpack.c.b16 %v331, %v330
      %v367 = vpack.c.b16 %v333, %v332
      %v368 = vpack.c.b16 %v335, %v334
      %v369 = vpack.c.b16 %v337, %v336
      %v370 = vpack.c.b16 %v339, %v338
      %v371 = vpack.c.b16 %v341, %v340
      %v372 = vpack.c.b16 %v343, %v342
      %v373 = vpack.c.b16 %v345, %v344
      %v374 = vpack.c.b16 %v347, %v346
      %v375 = vpack.c.b16 %v349, %v348
      %v376 = vpack.c.b16 %v351, %v350
      %v377 = vpack.c.b16 %v353, %v352
      %v378 = vpack.c.b16 %v355, %v354
      %v379 = vpack.c.b16 %v357, %v356
      %v380 = vpack.c.b16 %v359, %v358
      %vm381 = vcmask 23552
      %v383 = vsel %vm381, %v360, 0
      %v386 = vsel %vm381, %v361, 0
      %v389 = vsel %vm381, %v362, 0
      %v392 = vsel %vm381, %v363, 0
      %v395 = vsel %vm381, %v364, 0
      %v398 = vsel %vm381, %v365, 0
      %v401 = vsel %vm381, %v366, 0
      %v404 = vsel %vm381, %v367, 0
      %v407 = vsel %vm381, %v368, 0
      %v410 = vsel %vm381, %v369, 0
      %v413 = vsel %vm381, %v370, 0
      %v416 = vsel %vm381, %v371, 0
      %v419 = vsel %vm381, %v372, 0
      %v422 = vsel %vm381, %v373, 0
      %v425 = vsel %vm381, %v374, 0
      %v428 = vsel %vm381, %v375, 0
      %v431 = vsel %vm381, %v376, 0
      %v434 = vsel %vm381, %v377, 0
      %v437 = vsel %vm381, %v378, 0
      %v440 = vsel %vm381, %v379, 0
      %v443 = vsel %vm381, %v380, 0
      %vm445 = vcmask 1040384
      %vm446 = vcmask 1041408
      %v447 = vsel %vm445, 4294967295, 65535
      %v448 = vsel %vm446, %v447, 0
      %v450 = vand.u32 %v271, %v448
      %452 = vmatpush.bf16.msra.mxu0 0
      %453 = vmatpush.bf16.msra.mxu0 0
      %454 = vmatpush.bf16.msra.mxu0 0
      %455 = vmatpush.bf16.msra.mxu0 0
      %456 = vmatpush.bf16.msra.mxu0 0
      %457 = vmatpush.bf16.msra.mxu0 0
      %458 = vmatpush.bf16.msra.mxu0 0
      %459 = vmatpush.bf16.msra.mxu0 %v450
      %460 = vmatmul.bf16.gmra.mxu0 %v383
      %v461 = vpop.f32.mrf.mxu0
      %v462 = vadd.f32 %v274, %v461
      %v463 = vpop.f32.mrf.mxu0
      %v464 = vadd.f32 %v274, %v463
      %465 = vmatmul.bf16.gmra.mxu0 %v386
      %v466 = vpop.f32.mrf.mxu0
      %v467 = vadd.f32 %v274, %v466
      %v468 = vpop.f32.mrf.mxu0
      %v469 = vadd.f32 %v274, %v468
      %470 = vmatmul.bf16.gmra.mxu0 %v389
      %v471 = vpop.f32.mrf.mxu0
      %v472 = vadd.f32 %v274, %v471
      %v473 = vpop.f32.mrf.mxu0
      %v474 = vadd.f32 %v274, %v473
      %475 = vmatmul.bf16.gmra.mxu0 %v392
      %v476 = vpop.f32.mrf.mxu0
      %v477 = vadd.f32 %v274, %v476
      %v478 = vpop.f32.mrf.mxu0
      %v479 = vadd.f32 %v274, %v478
      %480 = vmatmul.bf16.gmra.mxu0 %v395
      %v481 = vpop.f32.mrf.mxu0
      %v482 = vadd.f32 %v274, %v481
      %v483 = vpop.f32.mrf.mxu0
      %v484 = vadd.f32 %v274, %v483
      %485 = vmatmul.bf16.gmra.mxu0 %v398
      %v486 = vpop.f32.mrf.mxu0
      %v487 = vadd.f32 %v274, %v486
      %v488 = vpop.f32.mrf.mxu0
      %v489 = vadd.f32 %v274, %v488
      %490 = vmatmul.bf16.gmra.mxu0 %v401
      %v491 = vpop.f32.mrf.mxu0
      %v492 = vadd.f32 %v274, %v491
      %v493 = vpop.f32.mrf.mxu0
      %v494 = vadd.f32 %v274, %v493
      %495 = vmatmul.bf16.gmra.mxu0 %v404
      %v496 = vpop.f32.mrf.mxu0
      %v497 = vadd.f32 %v274, %v496
      %v498 = vpop.f32.mrf.mxu0
      %v499 = vadd.f32 %v274, %v498
      %500 = vmatmul.bf16.gmra.mxu0 %v407
      %v501 = vpop.f32.mrf.mxu0
      %v502 = vadd.f32 %v274, %v501
      %v503 = vpop.f32.mrf.mxu0
      %v504 = vadd.f32 %v274, %v503
      %505 = vmatmul.bf16.gmra.mxu0 %v410
      %v506 = vpop.f32.mrf.mxu0
      %v507 = vadd.f32 %v274, %v506
      %v508 = vpop.f32.mrf.mxu0
      %v509 = vadd.f32 %v274, %v508
      %510 = vmatmul.bf16.gmra.mxu0 %v413
      %v511 = vpop.f32.mrf.mxu0
      %v512 = vadd.f32 %v274, %v511
      %v513 = vpop.f32.mrf.mxu0
      %v514 = vadd.f32 %v274, %v513
      %515 = vmatmul.bf16.gmra.mxu0 %v416
      %v516 = vpop.f32.mrf.mxu0
      %v517 = vadd.f32 %v274, %v516
      %v518 = vpop.f32.mrf.mxu0
      %v519 = vadd.f32 %v274, %v518
      %520 = vmatmul.bf16.gmra.mxu0 %v419
      %v521 = vpop.f32.mrf.mxu0
      %v522 = vadd.f32 %v274, %v521
      %v523 = vpop.f32.mrf.mxu0
      %v524 = vadd.f32 %v274, %v523
      %525 = vmatmul.bf16.gmra.mxu0 %v422
      %v526 = vpop.f32.mrf.mxu0
      %v527 = vadd.f32 %v274, %v526
      %v528 = vpop.f32.mrf.mxu0
      %v529 = vadd.f32 %v274, %v528
      %530 = vmatmul.bf16.gmra.mxu0 %v425
      %v531 = vpop.f32.mrf.mxu0
      %v532 = vadd.f32 %v274, %v531
      %v533 = vpop.f32.mrf.mxu0
      %v534 = vadd.f32 %v274, %v533
      %535 = vmatmul.bf16.gmra.mxu0 %v428
      %v536 = vpop.f32.mrf.mxu0
      %v537 = vadd.f32 %v274, %v536
      %v538 = vpop.f32.mrf.mxu0
      %v539 = vadd.f32 %v274, %v538
      %540 = vmatmul.bf16.gmra.mxu0 %v431
      %v541 = vpop.f32.mrf.mxu0
      %v542 = vadd.f32 %v274, %v541
      %v543 = vpop.f32.mrf.mxu0
      %v544 = vadd.f32 %v274, %v543
      %545 = vmatmul.bf16.gmra.mxu0 %v434
      %v546 = vpop.f32.mrf.mxu0
      %v547 = vadd.f32 %v274, %v546
      %v548 = vpop.f32.mrf.mxu0
      %v549 = vadd.f32 %v274, %v548
      %550 = vmatmul.bf16.gmra.mxu0 %v437
      %v551 = vpop.f32.mrf.mxu0
      %v552 = vadd.f32 %v274, %v551
      %v553 = vpop.f32.mrf.mxu0
      %v554 = vadd.f32 %v274, %v553
      %555 = vmatmul.bf16.gmra.mxu0 %v440
      %v556 = vpop.f32.mrf.mxu0
      %v557 = vadd.f32 %v274, %v556
      %v558 = vpop.f32.mrf.mxu0
      %v559 = vadd.f32 %v274, %v558
      %560 = vmatmul.bf16.gmra.mxu0 %v443
      %v561 = vpop.f32.mrf.mxu0
      %v562 = vadd.f32 %v274, %v561
      %v563 = vpop.f32.mrf.mxu0
      %v564 = vadd.f32 %v274, %v563
      %565 = vdwg.mxu0
      %v566 = vmax.f32 %v462, 0.0
      %v567 = vmax.f32 %v464, 0.0
      %v568 = vmax.f32 %v467, 0.0
      %v569 = vmax.f32 %v469, 0.0
      %v570 = vmax.f32 %v472, 0.0
      %v571 = vmax.f32 %v474, 0.0
      %v572 = vmax.f32 %v477, 0.0
      %v573 = vmax.f32 %v479, 0.0
      %v574 = vmax.f32 %v482, 0.0
      %v575 = vmax.f32 %v484, 0.0
      %v576 = vmax.f32 %v487, 0.0
      %v577 = vmax.f32 %v489, 0.0
      %v578 = vmax.f32 %v492, 0.0
      %v579 = vmax.f32 %v494, 0.0
      %v580 = vmax.f32 %v497, 0.0
      %v581 = vmax.f32 %v499, 0.0
      %v582 = vmax.f32 %v502, 0.0
      %v583 = vmax.f32 %v504, 0.0
      %v584 = vmax.f32 %v507, 0.0
      %v585 = vmax.f32 %v509, 0.0
      %v586 = vmax.f32 %v512, 0.0
      %v587 = vmax.f32 %v514, 0.0
      %v588 = vmax.f32 %v517, 0.0
      %v589 = vmax.f32 %v519, 0.0
      %v590 = vmax.f32 %v522, 0.0
      %v591 = vmax.f32 %v524, 0.0
      %v592 = vmax.f32 %v527, 0.0
      %v593 = vmax.f32 %v529, 0.0
      %v594 = vmax.f32 %v532, 0.0
      %v595 = vmax.f32 %v534, 0.0
      %v596 = vmax.f32 %v537, 0.0
      %v597 = vmax.f32 %v539, 0.0
      %v598 = vmax.f32 %v542, 0.0
      %v599 = vmax.f32 %v544, 0.0
      %v600 = vmax.f32 %v547, 0.0
      %v601 = vmax.f32 %v549, 0.0
      %v602 = vmax.f32 %v552, 0.0
      %v603 = vmax.f32 %v554, 0.0
      %v604 = vmax.f32 %v557, 0.0
      %v605 = vmax.f32 %v559, 0.0
      %v606 = vmax.f32 %v562, 0.0
      %v607 = vmax.f32 %v564, 0.0
      %v608 = vpack.c.bf16 %v567, %v566
      %v609 = vpack.c.bf16 %v569, %v568
      %v610 = vpack.c.bf16 %v571, %v570
      %v611 = vpack.c.bf16 %v573, %v572
      %v612 = vpack.c.bf16 %v575, %v574
      %v613 = vpack.c.bf16 %v577, %v576
      %v614 = vpack.c.bf16 %v579, %v578
      %v615 = vpack.c.bf16 %v581, %v580
      %v616 = vpack.c.bf16 %v583, %v582
      %v617 = vpack.c.bf16 %v585, %v584
      %v618 = vpack.c.bf16 %v587, %v586
      %v619 = vpack.c.bf16 %v589, %v588
      %v620 = vpack.c.bf16 %v591, %v590
      %v621 = vpack.c.bf16 %v593, %v592
      %v622 = vpack.c.bf16 %v595, %v594
      %v623 = vpack.c.bf16 %v597, %v596
      %v624 = vpack.c.bf16 %v599, %v598
      %v625 = vpack.c.bf16 %v601, %v600
      %v626 = vpack.c.bf16 %v603, %v602
      %v627 = vpack.c.bf16 %v605, %v604
      %v628 = vpack.c.bf16 %v607, %v606
      %v629 = vld [vmem:[%s3] sm:$0xf]
      %v630 = vld [vmem:[%s3 + $0x4] sm:$0xf]
      %v631 = vld [vmem:[%s3 + $0x8] sm:$0xf]
      %v632 = vld [vmem:[%s3 + $0xc] sm:$0xf]
      %v633 = vld [vmem:[%s3 + $0x10] sm:$0xf]
      %v634 = vld [vmem:[%s3 + $0x14] sm:$0xf]
      %v635 = vld [vmem:[%s3 + $0x18] sm:$0xf]
      %v636 = vld [vmem:[%s3 + $0x1c] sm:$0xf]
      %v637 = vld [vmem:[%s3 + $0x20] sm:$0xf]
      %v638 = vld [vmem:[%s3 + $0x24] sm:$0xf]
      %v639 = vld [vmem:[%s3 + $0x28] sm:$0xf]
      %v640 = vld [vmem:[%s3 + $0x2c] sm:$0xf]
      %v641 = vld [vmem:[%s3 + $0x30] sm:$0xf]
      %v642 = vld [vmem:[%s3 + $0x34] sm:$0xf]
      %v643 = vld [vmem:[%s3 + $0x38] sm:$0xf]
      %v644 = vld [vmem:[%s3 + $0x3c] sm:$0xf]
      %v645 = vld [vmem:[%s4] sm:$0x1]
      %v647 = vperm.slane %v645, 0
      %v665 = vunpack.c.l.b16 %v629
      %v666 = vunpack.c.l.b16 %v630
      %v667 = vunpack.c.l.b16 %v631
      %v668 = vunpack.c.l.b16 %v632
      %v669 = vunpack.c.l.b16 %v633
      %v670 = vunpack.c.l.b16 %v634
      %v671 = vunpack.c.l.b16 %v635
      %v672 = vunpack.c.l.b16 %v636
      %v673 = vunpack.c.l.b16 %v637
      %v674 = vunpack.c.l.b16 %v638
      %v675 = vunpack.c.l.b16 %v639
      %v676 = vunpack.c.l.b16 %v640
      %v677 = vunpack.c.l.b16 %v641
      %v678 = vunpack.c.l.b16 %v642
      %v679 = vunpack.c.l.b16 %v643
      %v680 = vunpack.c.l.b16 %v644
      %v681 = vpack.c.b16 %v666, %v665
      %v682 = vpack.c.b16 %v668, %v667
      %v683 = vpack.c.b16 %v670, %v669
      %v684 = vpack.c.b16 %v672, %v671
      %v685 = vpack.c.b16 %v674, %v673
      %v686 = vpack.c.b16 %v676, %v675
      %v687 = vpack.c.b16 %v678, %v677
      %v688 = vpack.c.b16 %v680, %v679
      %697 = vmatpush.bf16.msra.mxu0 %v688
      %698 = vmatpush.bf16.msra.mxu0 %v687
      %699 = vmatpush.bf16.msra.mxu0 %v686
      %700 = vmatpush.bf16.msra.mxu0 %v685
      %701 = vmatpush.bf16.msra.mxu0 %v684
      %702 = vmatpush.bf16.msra.mxu0 %v683
      %703 = vmatpush.bf16.msra.mxu0 %v682
      %704 = vmatpush.bf16.msra.mxu0 %v681
      %705 = vmatmul.bf16.gmra.mxu0 %v608
      %v706 = vpop.f32.mrf.mxu0
      %v707 = vadd.f32 %v647, %v706
      %v708 = vpop.f32.mrf.mxu0
      %v709 = vadd.f32 %v647, %v708
      %710 = vmatmul.bf16.gmra.mxu0 %v609
      %v711 = vpop.f32.mrf.mxu0
      %v712 = vadd.f32 %v647, %v711
      %v713 = vpop.f32.mrf.mxu0
      %v714 = vadd.f32 %v647, %v713
      %715 = vmatmul.bf16.gmra.mxu0 %v610
      %v716 = vpop.f32.mrf.mxu0
      %v717 = vadd.f32 %v647, %v716
      %v718 = vpop.f32.mrf.mxu0
      %v719 = vadd.f32 %v647, %v718
      %720 = vmatmul.bf16.gmra.mxu0 %v611
      %v721 = vpop.f32.mrf.mxu0
      %v722 = vadd.f32 %v647, %v721
      %v723 = vpop.f32.mrf.mxu0
      %v724 = vadd.f32 %v647, %v723
      %725 = vmatmul.bf16.gmra.mxu0 %v612
      %v726 = vpop.f32.mrf.mxu0
      %v727 = vadd.f32 %v647, %v726
      %v728 = vpop.f32.mrf.mxu0
      %v729 = vadd.f32 %v647, %v728
      %730 = vmatmul.bf16.gmra.mxu0 %v613
      %v731 = vpop.f32.mrf.mxu0
      %v732 = vadd.f32 %v647, %v731
      %v733 = vpop.f32.mrf.mxu0
      %v734 = vadd.f32 %v647, %v733
      %735 = vmatmul.bf16.gmra.mxu0 %v614
      %v736 = vpop.f32.mrf.mxu0
      %v737 = vadd.f32 %v647, %v736
      %v738 = vpop.f32.mrf.mxu0
      %v739 = vadd.f32 %v647, %v738
      %740 = vmatmul.bf16.gmra.mxu0 %v615
      %v741 = vpop.f32.mrf.mxu0
      %v742 = vadd.f32 %v647, %v741
      %v743 = vpop.f32.mrf.mxu0
      %v744 = vadd.f32 %v647, %v743
      %745 = vmatmul.bf16.gmra.mxu0 %v616
      %v746 = vpop.f32.mrf.mxu0
      %v747 = vadd.f32 %v647, %v746
      %v748 = vpop.f32.mrf.mxu0
      %v749 = vadd.f32 %v647, %v748
      %750 = vmatmul.bf16.gmra.mxu0 %v617
      %v751 = vpop.f32.mrf.mxu0
      %v752 = vadd.f32 %v647, %v751
      %v753 = vpop.f32.mrf.mxu0
      %v754 = vadd.f32 %v647, %v753
      %755 = vmatmul.bf16.gmra.mxu0 %v618
      %v756 = vpop.f32.mrf.mxu0
      %v757 = vadd.f32 %v647, %v756
      %v758 = vpop.f32.mrf.mxu0
      %v759 = vadd.f32 %v647, %v758
      %760 = vmatmul.bf16.gmra.mxu0 %v619
      %v761 = vpop.f32.mrf.mxu0
      %v762 = vadd.f32 %v647, %v761
      %v763 = vpop.f32.mrf.mxu0
      %v764 = vadd.f32 %v647, %v763
      %765 = vmatmul.bf16.gmra.mxu0 %v620
      %v766 = vpop.f32.mrf.mxu0
      %v767 = vadd.f32 %v647, %v766
      %v768 = vpop.f32.mrf.mxu0
      %v769 = vadd.f32 %v647, %v768
      %770 = vmatmul.bf16.gmra.mxu0 %v621
      %v771 = vpop.f32.mrf.mxu0
      %v772 = vadd.f32 %v647, %v771
      %v773 = vpop.f32.mrf.mxu0
      %v774 = vadd.f32 %v647, %v773
      %775 = vmatmul.bf16.gmra.mxu0 %v622
      %v776 = vpop.f32.mrf.mxu0
      %v777 = vadd.f32 %v647, %v776
      %v778 = vpop.f32.mrf.mxu0
      %v779 = vadd.f32 %v647, %v778
      %780 = vmatmul.bf16.gmra.mxu0 %v623
      %v781 = vpop.f32.mrf.mxu0
      %v782 = vadd.f32 %v647, %v781
      %v783 = vpop.f32.mrf.mxu0
      %v784 = vadd.f32 %v647, %v783
      %785 = vmatmul.bf16.gmra.mxu0 %v624
      %v786 = vpop.f32.mrf.mxu0
      %v787 = vadd.f32 %v647, %v786
      %v788 = vpop.f32.mrf.mxu0
      %v789 = vadd.f32 %v647, %v788
      %790 = vmatmul.bf16.gmra.mxu0 %v625
      %v791 = vpop.f32.mrf.mxu0
      %v792 = vadd.f32 %v647, %v791
      %v793 = vpop.f32.mrf.mxu0
      %v794 = vadd.f32 %v647, %v793
      %795 = vmatmul.bf16.gmra.mxu0 %v626
      %v796 = vpop.f32.mrf.mxu0
      %v797 = vadd.f32 %v647, %v796
      %v798 = vpop.f32.mrf.mxu0
      %v799 = vadd.f32 %v647, %v798
      %800 = vmatmul.bf16.gmra.mxu0 %v627
      %v801 = vpop.f32.mrf.mxu0
      %v802 = vadd.f32 %v647, %v801
      %v803 = vpop.f32.mrf.mxu0
      %v804 = vadd.f32 %v647, %v803
      %805 = vmatmul.bf16.gmra.mxu0 %v628
      %v806 = vpop.f32.mrf.mxu0
      %v807 = vadd.f32 %v647, %v806
      %v808 = vpop.f32.mrf.mxu0
      %v809 = vadd.f32 %v647, %v808
      %810 = vdwg.mxu0
      %811 = vst [vmem:[%s226] sm:$0xff] %v707
      %812 = vst [vmem:[%s226 + $0x8] sm:$0xff] %v709
      %813 = vst [vmem:[%s226 + $0x10] sm:$0xff] %v712
      %814 = vst [vmem:[%s226 + $0x18] sm:$0xff] %v714
      %815 = vst [vmem:[%s226 + $0x20] sm:$0xff] %v717
      %816 = vst [vmem:[%s226 + $0x28] sm:$0xff] %v719
      %817 = vst [vmem:[%s226 + $0x30] sm:$0xff] %v722
      %818 = vst [vmem:[%s226 + $0x38] sm:$0xff] %v724
      %819 = vst [vmem:[%s226 + $0x40] sm:$0xff] %v727
      %820 = vst [vmem:[%s226 + $0x48] sm:$0xff] %v729
      %821 = vst [vmem:[%s226 + $0x50] sm:$0xff] %v732
      %822 = vst [vmem:[%s226 + $0x58] sm:$0xff] %v734
      %823 = vst [vmem:[%s226 + $0x60] sm:$0xff] %v737
      %824 = vst [vmem:[%s226 + $0x68] sm:$0xff] %v739
      %825 = vst [vmem:[%s226 + $0x70] sm:$0xff] %v742
      %826 = vst [vmem:[%s226 + $0x78] sm:$0xff] %v744
      %827 = vst [vmem:[%s226 + $0x80] sm:$0xff] %v747
      %828 = vst [vmem:[%s226 + $0x88] sm:$0xff] %v749
      %829 = vst [vmem:[%s226 + $0x90] sm:$0xff] %v752
      %830 = vst [vmem:[%s226 + $0x98] sm:$0xff] %v754
      %831 = vst [vmem:[%s226 + $0xa0] sm:$0xff] %v757
      %832 = vst [vmem:[%s226 + $0xa8] sm:$0xff] %v759
      %833 = vst [vmem:[%s226 + $0xb0] sm:$0xff] %v762
      %834 = vst [vmem:[%s226 + $0xb8] sm:$0xff] %v764
      %835 = vst [vmem:[%s226 + $0xc0] sm:$0xff] %v767
      %836 = vst [vmem:[%s226 + $0xc8] sm:$0xff] %v769
      %837 = vst [vmem:[%s226 + $0xd0] sm:$0xff] %v772
      %838 = vst [vmem:[%s226 + $0xd8] sm:$0xff] %v774
      %839 = vst [vmem:[%s226 + $0xe0] sm:$0xff] %v777
      %840 = vst [vmem:[%s226 + $0xe8] sm:$0xff] %v779
      %841 = vst [vmem:[%s226 + $0xf0] sm:$0xff] %v782
      %842 = vst [vmem:[%s226 + $0xf8] sm:$0xff] %v784
      %843 = vst [vmem:[%s226 + $0x100] sm:$0xff] %v787
      %844 = vst [vmem:[%s226 + $0x108] sm:$0xff] %v789
      %845 = vst [vmem:[%s226 + $0x110] sm:$0xff] %v792
      %846 = vst [vmem:[%s226 + $0x118] sm:$0xff] %v794
      %847 = vst [vmem:[%s226 + $0x120] sm:$0xff] %v797
      %848 = vst [vmem:[%s226 + $0x128] sm:$0xff] %v799
      %849 = vst [vmem:[%s226 + $0x130] sm:$0xff] %v802
      %850 = vst [vmem:[%s226 + $0x138] sm:$0xff] %v804
      %851 = vst [vmem:[%s226 + $0x140] sm:$0xff] %v807
      %852 = vst [vmem:[%s226 + $0x148] sm:$0xff] %v809
      %s853 = smul.u32 42, %s16
      %p854 = scmp.lt.s32.totalorder %s853, 83
      %s855 = scalar_select %p854, %s853, 83
      %s856 = smul.addr %s855, 8
      %s857 = scalar_lea.vmem %s5, %s856
      // Predicated region
      $region41: #{shell2scale_forward.3} parent=39 // pred_check
        %p858 = pneg %p144
      $region42: #{shell2scale_forward.3} parent=39 // pred_check_branch
        %860 = sbr.rel (%p858) target = $region44
      $region43: #{shell2scale_forward.3} parent=39 // pred_region
        %s861 = smul.u32 42, %s16
      $region44: #{shell2scale_forward.3} parent=39 // pred_fallthru
        _
    $region40: #{shell2scale_forward.3} parent=5 // pred_fallthru
      _
    %p862 = scmp.le.s32.totalorder 2, %s11
    // Predicated region
    $region45: #{shell2scale_forward.3} parent=5 // pred_check
      %p863 = pneg %p862
    $region46: #{shell2scale_forward.3} parent=5 // pred_check_branch
      %865 = sbr.rel (%p863) target = $region48
    $region47: #{shell2scale_forward.3} parent=5 // pred_region
      %s866 = ssub.s32 %s11, 2
      // Predicated region
      $region49: #{shell2scale_forward.3} parent=47 // pred_check
        %p867 = pneg %p150
      $region50: #{shell2scale_forward.3} parent=47 // pred_check_branch
        %869 = sbr.rel (%p867) target = $region52
      $region51: #{shell2scale_forward.3} parent=47 // pred_region
        %s870 = smul.u32 42, %s17
        %p871 = scmp.lt.s32.totalorder %s870, 83
        %s872 = scalar_select %p871, %s870, 83
        %s873 = smul.addr %s872, 8
        %s874 = scalar_lea.vmem %s5, %s873
      $region52: #{shell2scale_forward.3} parent=47 // pred_fallthru
        _
    $region48: #{shell2scale_forward.3} parent=5 // pred_fallthru
      _
  $region6: #{shell2scale_forward.3} parent=0 // loop_footer
    %s15 = sadd.s32 1, %s11
  $region7: #{shell2scale_forward.3} parent=0 // loop_footer_branch
    %10 = sbr.rel target = $region3
  $region8: #{shell2scale_forward.3} parent=0 // loop_exit
    _

</llo_original>
